<compile_context>
chip_gen: v7x
topology: tpu7x:2x2x1
jax: 0.10.0
libtpu: 0.0.40
codegen_flags: <defaults>
</compile_context>

<pallas_src>
import functools

import jax
import jax.numpy as jnp
from jax import lax
from jax.experimental import pallas as pl
from jax.experimental.pallas import tpu as pltpu

INPUT_SIZE = 28
HIDDEN = 64
OUT = 10


def _lstm_linear_kernel(x_ref, wih_ref, whh_ref, b_ref, wout_ref, bout_ref,
                        o_ref, xp_ref, *, seq_len, batch):
    # x_ref:    (T*B, I_pad) time-major, batch-padded, lane-padded, flattened input
    # wih_ref:  (I_pad, 4H)  input->gates weight (torch gate column order [i, f, g, o])
    # whh_ref:  (H, 4H)      hidden->gates weight (same column order)
    # b_ref:    (1, 4H)      b_ih + b_hh
    # wout_ref: (H, 128)     final linear weight, zero-padded from (H, OUT)
    # bout_ref: (1, 128)     final bias, zero-padded
    # o_ref:    (B, 128)     lane-dense output (sliced to (B_real, OUT) outside)
    # xp_ref:   (T*B, 4H)    VMEM scratch holding the hoisted input projection
    T = seq_len
    B = batch
    H = whh_ref.shape[0]

    # Hoist the input projection + bias out of the serial recurrence: one MXU matmul
    # over all T*B rows (K padded to 128 so the operand feed is dense & unmasked).
    xp_ref[...] = (
        jnp.dot(x_ref[...], wih_ref[...], preferred_element_type=jnp.float32)
        + b_ref[...]
    )

    def step(t, carry):
        h, c = carry
        # Index whh_ref directly in the dot (no pre-loop hoist) so ~16 f32 vregs
        # aren't pinned live across the whole unrolled loop.
        gates = xp_ref[pl.ds(t * B, B), :] + jnp.dot(
            h, whh_ref[...], preferred_element_type=jnp.float32
        )  # (B, 4H), torch gate column order [i | f | g | o]
        # Full-width sigmoid over the whole (B, 4H) slab: clean 2-vreg EUP operand,
        # no masked 192-lane slice on the critical path (EUP slot has slack).
        sig = jax.nn.sigmoid(gates)
        i_g = sig[:, 0 * H:1 * H]
        f_g = sig[:, 1 * H:2 * H]
        o_g = sig[:, 3 * H:4 * H]
        g_g = jnp.tanh(gates[:, 2 * H:3 * H])
        # TODO(synk): if the bundle dump shows lane-select relayouts from the H=64
        #             half-vreg gate slices, duplicate h/c across both lane halves and
        #             realign with one pltpu.roll(shift=64) on the XLU slot instead.
        c_new = f_g * c + i_g * g_g
        h_new = o_g * jnp.tanh(c_new)
        return (h_new, c_new)

    h0 = jnp.zeros((B, H), dtype=jnp.float32)
    c0 = jnp.zeros((B, H), dtype=jnp.float32)
    # T is static and small -> fully unroll so the scheduler sees across-step ILP.
    h_last, _ = lax.fori_loop(0, T, step, (h0, c0), unroll=True)

    out = jnp.dot(h_last, wout_ref[...], preferred_element_type=jnp.float32) + bout_ref[...]
    o_ref[...] = out.astype(o_ref.dtype)


def rnn_forward(x, w_ih, w_hh, b_ih, b_hh, w_out, b_out):
    """x: (B, T, I) float32, batch_first like the PyTorch module.
    Weights in torch layout: w_ih (4H, I), w_hh (4H, H), b_* (4H,),
    w_out (OUT, H), b_out (OUT,). Returns (B, OUT) float32."""
    B, T, I = x.shape
    H = w_hh.shape[1]
    OUTD = w_out.shape[0]

    B_pad = max(8, ((B + 7) // 8) * 8)        # full sublane
    I_pad = max(128, ((I + 127) // 128) * 128)  # lane-dense K for the input projection
    OUT_pad = 128                              # lane-dense output store

    # Keep torch gate order [i, f, g, o]; no column reorder needed since the kernel
    # applies sigmoid full-width and slices individual gates afterwards.
    wih_t = jnp.transpose(w_ih.astype(jnp.float32))            # (I, 4H)
    wih_t = jnp.pad(wih_t, ((0, I_pad - I), (0, 0)))           # (I_pad, 4H), zero rows
    whh_t = jnp.transpose(w_hh.astype(jnp.float32))            # (H, 4H)
    b_sum = (b_ih + b_hh).astype(jnp.float32).reshape(1, 4 * H)

    wout_t = jnp.zeros((H, OUT_pad), jnp.float32)
    wout_t = wout_t.at[:, :OUTD].set(jnp.transpose(w_out).astype(jnp.float32))
    bout_r = jnp.zeros((1, OUT_pad), jnp.float32)
    bout_r = bout_r.at[:, :OUTD].set(b_out.astype(jnp.float32))

    # time-major, pad batch to a full sublane and features to 128 lanes, flatten to
    # (T*B_pad, I_pad) so the input projection is a single dense 2-D matmul in-kernel.
    x_tm = jnp.transpose(x.astype(jnp.float32), (1, 0, 2))               # (T, B, I)
    x_tm = jnp.pad(x_tm, ((0, 0), (0, B_pad - B), (0, I_pad - I)))       # (T, B_pad, I_pad)
    x_flat = x_tm.reshape(T * B_pad, I_pad)

    vmem = pltpu.MemorySpace.VMEM
    kernel = functools.partial(_lstm_linear_kernel, seq_len=T, batch=B_pad)
    out = pl.pallas_call(
        kernel,
        out_shape=jax.ShapeDtypeStruct((B_pad, OUT_pad), jnp.float32),
        in_specs=[
            pl.BlockSpec(memory_space=vmem),  # x (T*B_pad, I_pad)
            pl.BlockSpec(memory_space=vmem),  # w_ih^T (padded K)
            pl.BlockSpec(memory_space=vmem),  # w_hh^T
            pl.BlockSpec(memory_space=vmem),  # bias
            pl.BlockSpec(memory_space=vmem),  # w_out^T (padded)
            pl.BlockSpec(memory_space=vmem),  # b_out (padded)
        ],
        out_specs=pl.BlockSpec(memory_space=vmem),
        scratch_shapes=[pltpu.VMEM((T * B_pad, 4 * H), jnp.float32)],
    )(x_flat, wih_t, whh_t, b_sum, wout_t, bout_r)
    return out[:B, :OUTD]


def _reference(x, w_ih, w_hh, b_ih, b_hh, w_out, b_out):
    """Pure-JAX reference matching torch.nn.LSTM + Linear forward (gate order i,f,g,o)."""
    B, T, I = x.shape
    H = w_hh.shape[1]
    h = jnp.zeros((B, H), jnp.float32)
    c = jnp.zeros((B, H), jnp.float32)
    for t in range(T):
        gates = x[:, t, :] @ w_ih.T + h @ w_hh.T + b_ih + b_hh
        i_g = jax.nn.sigmoid(gates[:, 0 * H:1 * H])
        f_g = jax.nn.sigmoid(gates[:, 1 * H:2 * H])
        g_g = jnp.tanh(gates[:, 2 * H:3 * H])
        o_g = jax.nn.sigmoid(gates[:, 3 * H:4 * H])
        c = f_g * c + i_g * g_g
        h = o_g * jnp.tanh(c)
    return h @ w_out.T + b_out


if __name__ == "__main__":
    key = jax.random.PRNGKey(0)
    B, T, I, H = 2, 8, INPUT_SIZE, HIDDEN

    ks = jax.random.split(key, 8)
    bound = 1.0 / jnp.sqrt(jnp.float32(H))  # PyTorch default uniform init bound
    w_ih = jax.random.uniform(ks[0], (4 * H, I), jnp.float32, -bound, bound)
    w_hh = jax.random.uniform(ks[1], (4 * H, H), jnp.float32, -bound, bound)
    b_ih = jax.random.uniform(ks[2], (4 * H,), jnp.float32, -bound, bound)
    b_hh = jax.random.uniform(ks[3], (4 * H,), jnp.float32, -bound, bound)
    w_out = jax.random.uniform(ks[4], (OUT, H), jnp.float32, -bound, bound)
    b_out = jax.random.uniform(ks[5], (OUT,), jnp.float32, -bound, bound)
    x = jax.random.normal(ks[6], (B, T, I), jnp.float32)

    out = rnn_forward(x, w_ih, w_hh, b_ih, b_hh, w_out, b_out)
    out = jax.block_until_ready(out)

    ref = _reference(x, w_ih, w_hh, b_ih, b_hh, w_out, b_out)
    assert out.shape == (B, OUT), out.shape
    assert jnp.allclose(out, ref, atol=1e-4, rtol=1e-4), float(jnp.max(jnp.abs(out - ref)))

    print("KERNEL_OK")
</pallas_src>

<mosaic_0001>
module attributes {stable_mosaic.version = 11 : i64} {
  func.func @_lstm_linear_kernel(%arg0: memref<64x128xf32, #tpu.memory_space<vmem>>, %arg1: memref<128x256xf32, #tpu.memory_space<vmem>>, %arg2: memref<64x256xf32, #tpu.memory_space<vmem>>, %arg3: memref<1x256xf32, #tpu.memory_space<vmem>>, %arg4: memref<64x128xf32, #tpu.memory_space<vmem>>, %arg5: memref<1x128xf32, #tpu.memory_space<vmem>>, %arg6: memref<8x128xf32, #tpu.memory_space<vmem>>, %arg7: memref<64x256xf32, #tpu.memory_space<vmem>>) attributes {dimension_semantics = [], scalar_prefetch = 0 : i64, scratch_operands = 1 : i64, tpu.core_type = #tpu.core_type<tc>} {
    %c0 = arith.constant 0 : index
    %c0_0 = arith.constant 0 : index
    %0 = vector.load %arg0[%c0, %c0_0] : memref<64x128xf32, #tpu.memory_space<vmem>>, vector<64x128xf32>
    %c0_1 = arith.constant 0 : index
    %c0_2 = arith.constant 0 : index
    %1 = vector.load %arg1[%c0_1, %c0_2] : memref<128x256xf32, #tpu.memory_space<vmem>>, vector<128x256xf32>
    %cst = arith.constant dense<0.000000e+00> : vector<64x256xf32>
    %2 = tpu.matmul %0, %1, %cst {dimension_numbers = #tpu.dot_dimension_numbers<[1], [0], [0], [1], [0, 0, 1, 1], [], []>} : vector<64x128xf32>, vector<128x256xf32>, vector<64x256xf32> -> vector<64x256xf32>
    %c0_3 = arith.constant 0 : index
    %c0_4 = arith.constant 0 : index
    %3 = vector.load %arg3[%c0_3, %c0_4] : memref<1x256xf32, #tpu.memory_space<vmem>>, vector<1x256xf32>
    %4 = vector.broadcast %3 : vector<1x256xf32> to vector<64x256xf32>
    %5 = arith.addf %2, %4 : vector<64x256xf32>
    %c0_5 = arith.constant 0 : index
    %c0_6 = arith.constant 0 : index
    %6 = vector.load %arg7[%c0_5, %c0_6] : memref<64x256xf32, #tpu.memory_space<vmem>>, vector<64x256xf32>
    tpu.vector_store %arg7[%c0_5, %c0_6], %5 {strides = array<i32>} : memref<64x256xf32, #tpu.memory_space<vmem>>, vector<64x256xf32>,
    %cst_7 = arith.constant 0.000000e+00 : f32
    %7 = vector.broadcast %cst_7 : f32 to vector<8x64xf32>
    %cst_8 = arith.constant 0.000000e+00 : f32
    %8 = vector.broadcast %cst_8 : f32 to vector<8x64xf32>
    %c0_i32 = arith.constant 0 : i32
    %c8_i32 = arith.constant 8 : i32
    %9 = arith.muli %c0_i32, %c8_i32 : i32
    %10 = arith.index_cast %9 : i32 to index
    %c0_9 = arith.constant 0 : index
    %11 = vector.load %arg7[%10, %c0_9] : memref<64x256xf32, #tpu.memory_space<vmem>>, vector<8x256xf32>
    %c0_10 = arith.constant 0 : index
    %c0_11 = arith.constant 0 : index
    %12 = vector.load %arg2[%c0_10, %c0_11] : memref<64x256xf32, #tpu.memory_space<vmem>>, vector<64x256xf32>
    %cst_12 = arith.constant dense<0.000000e+00> : vector<8x256xf32>
    %13 = tpu.matmul %7, %12, %cst_12 {dimension_numbers = #tpu.dot_dimension_numbers<[1], [0], [0], [1], [0, 0, 1, 1], [], []>} : vector<8x64xf32>, vector<64x256xf32>, vector<8x256xf32> -> vector<8x256xf32>
    %14 = arith.addf %11, %13 : vector<8x256xf32>
    %15 = arith.negf %14 : vector<8x256xf32>
    %16 = math.exp %15 : vector<8x256xf32>
    %cst_13 = arith.constant 1.000000e+00 : f32
    %17 = vector.broadcast %cst_13 : f32 to vector<8x256xf32>
    %18 = arith.addf %17, %16 : vector<8x256xf32>
    %19 = arith.divf %17, %18 : vector<8x256xf32>
    %20 = vector.extract_strided_slice %19 {offsets = [0, 0], sizes = [8, 64], strides = [1, 1]} : vector<8x256xf32> to vector<8x64xf32>
    %21 = vector.extract_strided_slice %19 {offsets = [0, 64], sizes = [8, 64], strides = [1, 1]} : vector<8x256xf32> to vector<8x64xf32>
    %22 = vector.extract_strided_slice %19 {offsets = [0, 192], sizes = [8, 64], strides = [1, 1]} : vector<8x256xf32> to vector<8x64xf32>
    %23 = vector.extract_strided_slice %14 {offsets = [0, 128], sizes = [8, 64], strides = [1, 1]} : vector<8x256xf32> to vector<8x64xf32>
    %24 = math.tanh %23 : vector<8x64xf32>
    %25 = arith.mulf %21, %8 : vector<8x64xf32>
    %26 = arith.mulf %20, %24 : vector<8x64xf32>
    %27 = arith.addf %25, %26 : vector<8x64xf32>
    %28 = math.tanh %27 : vector<8x64xf32>
    %29 = arith.mulf %22, %28 : vector<8x64xf32>
    %c1_i32 = arith.constant 1 : i32
    %c8_i32_14 = arith.constant 8 : i32
    %30 = arith.muli %c1_i32, %c8_i32_14 : i32
    %31 = arith.index_cast %30 : i32 to index
    %c0_15 = arith.constant 0 : index
    %32 = vector.load %arg7[%31, %c0_15] : memref<64x256xf32, #tpu.memory_space<vmem>>, vector<8x256xf32>
    %c0_16 = arith.constant 0 : index
    %c0_17 = arith.constant 0 : index
    %33 = vector.load %arg2[%c0_16, %c0_17] : memref<64x256xf32, #tpu.memory_space<vmem>>, vector<64x256xf32>
    %cst_18 = arith.constant dense<0.000000e+00> : vector<8x256xf32>
    %34 = tpu.matmul %29, %33, %cst_18 {dimension_numbers = #tpu.dot_dimension_numbers<[1], [0], [0], [1], [0, 0, 1, 1], [], []>} : vector<8x64xf32>, vector<64x256xf32>, vector<8x256xf32> -> vector<8x256xf32>
    %35 = arith.addf %32, %34 : vector<8x256xf32>
    %36 = arith.negf %35 : vector<8x256xf32>
    %37 = math.exp %36 : vector<8x256xf32>
    %cst_19 = arith.constant 1.000000e+00 : f32
    %38 = vector.broadcast %cst_19 : f32 to vector<8x256xf32>
    %39 = arith.addf %38, %37 : vector<8x256xf32>
    %40 = arith.divf %38, %39 : vector<8x256xf32>
    %41 = vector.extract_strided_slice %40 {offsets = [0, 0], sizes = [8, 64], strides = [1, 1]} : vector<8x256xf32> to vector<8x64xf32>
    %42 = vector.extract_strided_slice %40 {offsets = [0, 64], sizes = [8, 64], strides = [1, 1]} : vector<8x256xf32> to vector<8x64xf32>
    %43 = vector.extract_strided_slice %40 {offsets = [0, 192], sizes = [8, 64], strides = [1, 1]} : vector<8x256xf32> to vector<8x64xf32>
    %44 = vector.extract_strided_slice %35 {offsets = [0, 128], sizes = [8, 64], strides = [1, 1]} : vector<8x256xf32> to vector<8x64xf32>
    %45 = math.tanh %44 : vector<8x64xf32>
    %46 = arith.mulf %42, %27 : vector<8x64xf32>
    %47 = arith.mulf %41, %45 : vector<8x64xf32>
    %48 = arith.addf %46, %47 : vector<8x64xf32>
    %49 = math.tanh %48 : vector<8x64xf32>
    %50 = arith.mulf %43, %49 : vector<8x64xf32>
    %c2_i32 = arith.constant 2 : i32
    %c8_i32_20 = arith.constant 8 : i32
    %51 = arith.muli %c2_i32, %c8_i32_20 : i32
    %52 = arith.index_cast %51 : i32 to index
    %c0_21 = arith.constant 0 : index
    %53 = vector.load %arg7[%52, %c0_21] : memref<64x256xf32, #tpu.memory_space<vmem>>, vector<8x256xf32>
    %c0_22 = arith.constant 0 : index
    %c0_23 = arith.constant 0 : index
    %54 = vector.load %arg2[%c0_22, %c0_23] : memref<64x256xf32, #tpu.memory_space<vmem>>, vector<64x256xf32>
    %cst_24 = arith.constant dense<0.000000e+00> : vector<8x256xf32>
    %55 = tpu.matmul %50, %54, %cst_24 {dimension_numbers = #tpu.dot_dimension_numbers<[1], [0], [0], [1], [0, 0, 1, 1], [], []>} : vector<8x64xf32>, vector<64x256xf32>, vector<8x256xf32> -> vector<8x256xf32>
    %56 = arith.addf %53, %55 : vector<8x256xf32>
    %57 = arith.negf %56 : vector<8x256xf32>
    %58 = math.exp %57 : vector<8x256xf32>
    %cst_25 = arith.constant 1.000000e+00 : f32
    %59 = vector.broadcast %cst_25 : f32 to vector<8x256xf32>
    %60 = arith.addf %59, %58 : vector<8x256xf32>
    %61 = arith.divf %59, %60 : vector<8x256xf32>
    %62 = vector.extract_strided_slice %61 {offsets = [0, 0], sizes = [8, 64], strides = [1, 1]} : vector<8x256xf32> to vector<8x64xf32>
    %63 = vector.extract_strided_slice %61 {offsets = [0, 64], sizes = [8, 64], strides = [1, 1]} : vector<8x256xf32> to vector<8x64xf32>
    %64 = vector.extract_strided_slice %61 {offsets = [0, 192], sizes = [8, 64], strides = [1, 1]} : vector<8x256xf32> to vector<8x64xf32>
    %65 = vector.extract_strided_slice %56 {offsets = [0, 128], sizes = [8, 64], strides = [1, 1]} : vector<8x256xf32> to vector<8x64xf32>
    %66 = math.tanh %65 : vector<8x64xf32>
    %67 = arith.mulf %63, %48 : vector<8x64xf32>
    %68 = arith.mulf %62, %66 : vector<8x64xf32>
    %69 = arith.addf %67, %68 : vector<8x64xf32>
    %70 = math.tanh %69 : vector<8x64xf32>
    %71 = arith.mulf %64, %70 : vector<8x64xf32>
    %c3_i32 = arith.constant 3 : i32
    %c8_i32_26 = arith.constant 8 : i32
    %72 = arith.muli %c3_i32, %c8_i32_26 : i32
    %73 = arith.index_cast %72 : i32 to index
    %c0_27 = arith.constant 0 : index
    %74 = vector.load %arg7[%73, %c0_27] : memref<64x256xf32, #tpu.memory_space<vmem>>, vector<8x256xf32>
    %c0_28 = arith.constant 0 : index
    %c0_29 = arith.constant 0 : index
    %75 = vector.load %arg2[%c0_28, %c0_29] : memref<64x256xf32, #tpu.memory_space<vmem>>, vector<64x256xf32>
    %cst_30 = arith.constant dense<0.000000e+00> : vector<8x256xf32>
    %76 = tpu.matmul %71, %75, %cst_30 {dimension_numbers = #tpu.dot_dimension_numbers<[1], [0], [0], [1], [0, 0, 1, 1], [], []>} : vector<8x64xf32>, vector<64x256xf32>, vector<8x256xf32> -> vector<8x256xf32>
    %77 = arith.addf %74, %76 : vector<8x256xf32>
    %78 = arith.negf %77 : vector<8x256xf32>
    %79 = math.exp %78 : vector<8x256xf32>
    %cst_31 = arith.constant 1.000000e+00 : f32
    %80 = vector.broadcast %cst_31 : f32 to vector<8x256xf32>
    %81 = arith.addf %80, %79 : vector<8x256xf32>
    %82 = arith.divf %80, %81 : vector<8x256xf32>
    %83 = vector.extract_strided_slice %82 {offsets = [0, 0], sizes = [8, 64], strides = [1, 1]} : vector<8x256xf32> to vector<8x64xf32>
    %84 = vector.extract_strided_slice %82 {offsets = [0, 64], sizes = [8, 64], strides = [1, 1]} : vector<8x256xf32> to vector<8x64xf32>
    %85 = vector.extract_strided_slice %82 {offsets = [0, 192], sizes = [8, 64], strides = [1, 1]} : vector<8x256xf32> to vector<8x64xf32>
    %86 = vector.extract_strided_slice %77 {offsets = [0, 128], sizes = [8, 64], strides = [1, 1]} : vector<8x256xf32> to vector<8x64xf32>
    %87 = math.tanh %86 : vector<8x64xf32>
    %88 = arith.mulf %84, %69 : vector<8x64xf32>
    %89 = arith.mulf %83, %87 : vector<8x64xf32>
    %90 = arith.addf %88, %89 : vector<8x64xf32>
    %91 = math.tanh %90 : vector<8x64xf32>
    %92 = arith.mulf %85, %91 : vector<8x64xf32>
    %c4_i32 = arith.constant 4 : i32
    %c8_i32_32 = arith.constant 8 : i32
    %93 = arith.muli %c4_i32, %c8_i32_32 : i32
    %94 = arith.index_cast %93 : i32 to index
    %c0_33 = arith.constant 0 : index
    %95 = vector.load %arg7[%94, %c0_33] : memref<64x256xf32, #tpu.memory_space<vmem>>, vector<8x256xf32>
    %c0_34 = arith.constant 0 : index
    %c0_35 = arith.constant 0 : index
    %96 = vector.load %arg2[%c0_34, %c0_35] : memref<64x256xf32, #tpu.memory_space<vmem>>, vector<64x256xf32>
    %cst_36 = arith.constant dense<0.000000e+00> : vector<8x256xf32>
    %97 = tpu.matmul %92, %96, %cst_36 {dimension_numbers = #tpu.dot_dimension_numbers<[1], [0], [0], [1], [0, 0, 1, 1], [], []>} : vector<8x64xf32>, vector<64x256xf32>, vector<8x256xf32> -> vector<8x256xf32>
    %98 = arith.addf %95, %97 : vector<8x256xf32>
    %99 = arith.negf %98 : vector<8x256xf32>
    %100 = math.exp %99 : vector<8x256xf32>
    %cst_37 = arith.constant 1.000000e+00 : f32
    %101 = vector.broadcast %cst_37 : f32 to vector<8x256xf32>
    %102 = arith.addf %101, %100 : vector<8x256xf32>
    %103 = arith.divf %101, %102 : vector<8x256xf32>
    %104 = vector.extract_strided_slice %103 {offsets = [0, 0], sizes = [8, 64], strides = [1, 1]} : vector<8x256xf32> to vector<8x64xf32>
    %105 = vector.extract_strided_slice %103 {offsets = [0, 64], sizes = [8, 64], strides = [1, 1]} : vector<8x256xf32> to vector<8x64xf32>
    %106 = vector.extract_strided_slice %103 {offsets = [0, 192], sizes = [8, 64], strides = [1, 1]} : vector<8x256xf32> to vector<8x64xf32>
    %107 = vector.extract_strided_slice %98 {offsets = [0, 128], sizes = [8, 64], strides = [1, 1]} : vector<8x256xf32> to vector<8x64xf32>
    %108 = math.tanh %107 : vector<8x64xf32>
    %109 = arith.mulf %105, %90 : vector<8x64xf32>
    %110 = arith.mulf %104, %108 : vector<8x64xf32>
    %111 = arith.addf %109, %110 : vector<8x64xf32>
    %112 = math.tanh %111 : vector<8x64xf32>
    %113 = arith.mulf %106, %112 : vector<8x64xf32>
    %c5_i32 = arith.constant 5 : i32
    %c8_i32_38 = arith.constant 8 : i32
    %114 = arith.muli %c5_i32, %c8_i32_38 : i32
    %115 = arith.index_cast %114 : i32 to index
    %c0_39 = arith.constant 0 : index
    %116 = vector.load %arg7[%115, %c0_39] : memref<64x256xf32, #tpu.memory_space<vmem>>, vector<8x256xf32>
    %c0_40 = arith.constant 0 : index
    %c0_41 = arith.constant 0 : index
    %117 = vector.load %arg2[%c0_40, %c0_41] : memref<64x256xf32, #tpu.memory_space<vmem>>, vector<64x256xf32>
    %cst_42 = arith.constant dense<0.000000e+00> : vector<8x256xf32>
    %118 = tpu.matmul %113, %117, %cst_42 {dimension_numbers = #tpu.dot_dimension_numbers<[1], [0], [0], [1], [0, 0, 1, 1], [], []>} : vector<8x64xf32>, vector<64x256xf32>, vector<8x256xf32> -> vector<8x256xf32>
    %119 = arith.addf %116, %118 : vector<8x256xf32>
    %120 = arith.negf %119 : vector<8x256xf32>
    %121 = math.exp %120 : vector<8x256xf32>
    %cst_43 = arith.constant 1.000000e+00 : f32
    %122 = vector.broadcast %cst_43 : f32 to vector<8x256xf32>
    %123 = arith.addf %122, %121 : vector<8x256xf32>
    %124 = arith.divf %122, %123 : vector<8x256xf32>
    %125 = vector.extract_strided_slice %124 {offsets = [0, 0], sizes = [8, 64], strides = [1, 1]} : vector<8x256xf32> to vector<8x64xf32>
    %126 = vector.extract_strided_slice %124 {offsets = [0, 64], sizes = [8, 64], strides = [1, 1]} : vector<8x256xf32> to vector<8x64xf32>
    %127 = vector.extract_strided_slice %124 {offsets = [0, 192], sizes = [8, 64], strides = [1, 1]} : vector<8x256xf32> to vector<8x64xf32>
    %128 = vector.extract_strided_slice %119 {offsets = [0, 128], sizes = [8, 64], strides = [1, 1]} : vector<8x256xf32> to vector<8x64xf32>
    %129 = math.tanh %128 : vector<8x64xf32>
    %130 = arith.mulf %126, %111 : vector<8x64xf32>
    %131 = arith.mulf %125, %129 : vector<8x64xf32>
    %132 = arith.addf %130, %131 : vector<8x64xf32>
    %133 = math.tanh %132 : vector<8x64xf32>
    %134 = arith.mulf %127, %133 : vector<8x64xf32>
    %c6_i32 = arith.constant 6 : i32
    %c8_i32_44 = arith.constant 8 : i32
    %135 = arith.muli %c6_i32, %c8_i32_44 : i32
    %136 = arith.index_cast %135 : i32 to index
    %c0_45 = arith.constant 0 : index
    %137 = vector.load %arg7[%136, %c0_45] : memref<64x256xf32, #tpu.memory_space<vmem>>, vector<8x256xf32>
    %c0_46 = arith.constant 0 : index
    %c0_47 = arith.constant 0 : index
    %138 = vector.load %arg2[%c0_46, %c0_47] : memref<64x256xf32, #tpu.memory_space<vmem>>, vector<64x256xf32>
    %cst_48 = arith.constant dense<0.000000e+00> : vector<8x256xf32>
    %139 = tpu.matmul %134, %138, %cst_48 {dimension_numbers = #tpu.dot_dimension_numbers<[1], [0], [0], [1], [0, 0, 1, 1], [], []>} : vector<8x64xf32>, vector<64x256xf32>, vector<8x256xf32> -> vector<8x256xf32>
    %140 = arith.addf %137, %139 : vector<8x256xf32>
    %141 = arith.negf %140 : vector<8x256xf32>
    %142 = math.exp %141 : vector<8x256xf32>
    %cst_49 = arith.constant 1.000000e+00 : f32
    %143 = vector.broadcast %cst_49 : f32 to vector<8x256xf32>
    %144 = arith.addf %143, %142 : vector<8x256xf32>
    %145 = arith.divf %143, %144 : vector<8x256xf32>
    %146 = vector.extract_strided_slice %145 {offsets = [0, 0], sizes = [8, 64], strides = [1, 1]} : vector<8x256xf32> to vector<8x64xf32>
    %147 = vector.extract_strided_slice %145 {offsets = [0, 64], sizes = [8, 64], strides = [1, 1]} : vector<8x256xf32> to vector<8x64xf32>
    %148 = vector.extract_strided_slice %145 {offsets = [0, 192], sizes = [8, 64], strides = [1, 1]} : vector<8x256xf32> to vector<8x64xf32>
    %149 = vector.extract_strided_slice %140 {offsets = [0, 128], sizes = [8, 64], strides = [1, 1]} : vector<8x256xf32> to vector<8x64xf32>
    %150 = math.tanh %149 : vector<8x64xf32>
    %151 = arith.mulf %147, %132 : vector<8x64xf32>
    %152 = arith.mulf %146, %150 : vector<8x64xf32>
    %153 = arith.addf %151, %152 : vector<8x64xf32>
    %154 = math.tanh %153 : vector<8x64xf32>
    %155 = arith.mulf %148, %154 : vector<8x64xf32>
    %c7_i32 = arith.constant 7 : i32
    %c8_i32_50 = arith.constant 8 : i32
    %156 = arith.muli %c7_i32, %c8_i32_50 : i32
    %157 = arith.index_cast %156 : i32 to index
    %c0_51 = arith.constant 0 : index
    %158 = vector.load %arg7[%157, %c0_51] : memref<64x256xf32, #tpu.memory_space<vmem>>, vector<8x256xf32>
    %c0_52 = arith.constant 0 : index
    %c0_53 = arith.constant 0 : index
    %159 = vector.load %arg2[%c0_52, %c0_53] : memref<64x256xf32, #tpu.memory_space<vmem>>, vector<64x256xf32>
    %cst_54 = arith.constant dense<0.000000e+00> : vector<8x256xf32>
    %160 = tpu.matmul %155, %159, %cst_54 {dimension_numbers = #tpu.dot_dimension_numbers<[1], [0], [0], [1], [0, 0, 1, 1], [], []>} : vector<8x64xf32>, vector<64x256xf32>, vector<8x256xf32> -> vector<8x256xf32>
    %161 = arith.addf %158, %160 : vector<8x256xf32>
    %162 = arith.negf %161 : vector<8x256xf32>
    %163 = math.exp %162 : vector<8x256xf32>
    %cst_55 = arith.constant 1.000000e+00 : f32
    %164 = vector.broadcast %cst_55 : f32 to vector<8x256xf32>
    %165 = arith.addf %164, %163 : vector<8x256xf32>
    %166 = arith.divf %164, %165 : vector<8x256xf32>
    %167 = vector.extract_strided_slice %166 {offsets = [0, 0], sizes = [8, 64], strides = [1, 1]} : vector<8x256xf32> to vector<8x64xf32>
    %168 = vector.extract_strided_slice %166 {offsets = [0, 64], sizes = [8, 64], strides = [1, 1]} : vector<8x256xf32> to vector<8x64xf32>
    %169 = vector.extract_strided_slice %166 {offsets = [0, 192], sizes = [8, 64], strides = [1, 1]} : vector<8x256xf32> to vector<8x64xf32>
    %170 = vector.extract_strided_slice %161 {offsets = [0, 128], sizes = [8, 64], strides = [1, 1]} : vector<8x256xf32> to vector<8x64xf32>
    %171 = math.tanh %170 : vector<8x64xf32>
    %172 = arith.mulf %168, %153 : vector<8x64xf32>
    %173 = arith.mulf %167, %171 : vector<8x64xf32>
    %174 = arith.addf %172, %173 : vector<8x64xf32>
    %175 = math.tanh %174 : vector<8x64xf32>
    %176 = arith.mulf %169, %175 : vector<8x64xf32>
    %c8_i32_56 = arith.constant 8 : i32
    %c0_57 = arith.constant 0 : index
    %c0_58 = arith.constant 0 : index
    %177 = vector.load %arg4[%c0_57, %c0_58] : memref<64x128xf32, #tpu.memory_space<vmem>>, vector<64x128xf32>
    %cst_59 = arith.constant dense<0.000000e+00> : vector<8x128xf32>
    %178 = tpu.matmul %176, %177, %cst_59 {dimension_numbers = #tpu.dot_dimension_numbers<[1], [0], [0], [1], [0, 0, 1, 1], [], []>} : vector<8x64xf32>, vector<64x128xf32>, vector<8x128xf32> -> vector<8x128xf32>
    %c0_60 = arith.constant 0 : index
    %c0_61 = arith.constant 0 : index
    %179 = vector.load %arg5[%c0_60, %c0_61] : memref<1x128xf32, #tpu.memory_space<vmem>>, vector<1x128xf32>
    %180 = vector.broadcast %179 : vector<1x128xf32> to vector<8x128xf32>
    %181 = arith.addf %178, %180 : vector<8x128xf32>
    %c0_62 = arith.constant 0 : index
    %c0_63 = arith.constant 0 : index
    %182 = vector.load %arg6[%c0_62, %c0_63] : memref<8x128xf32, #tpu.memory_space<vmem>>, vector<8x128xf32>
    tpu.vector_store %arg6[%c0_62, %c0_63], %181 {strides = array<i32>} : memref<8x128xf32, #tpu.memory_space<vmem>>, vector<8x128xf32>,
    return
  }
}

</mosaic_0001>

<llo_original>
// kernel: tpu_custom_call.1
$region0: #{tpu_custom_call.1}
  #allocation0 [shape = 'u32[]', space=smem, size = 0x4, offset = 0x4, fixed_abs, tag = 'smem constant byte address 0x4 - core index']
  #allocation1 [shape = 'u32[144,128]{1,0:T(1,128)}', space=vmem, size = 0x12000, scoped, tag = 'internal scratch']
  #allocation2 [shape = 'f32[64,256]{1,0:T(8,128)}', space=vmem, size = 0x10000, scoped, tag = 'scratch operand']
  %s0 = inlined_call_operand.hbm [shape: f32[64,128], index: 0, kind: input, shape index: {}]
  %s1 = inlined_call_operand.hbm [shape: f32[128,256], index: 1, kind: input, shape index: {}]
  %s2 = inlined_call_operand.hbm [shape: f32[64,256], index: 2, kind: input, shape index: {}]
  %s3 = inlined_call_operand.vmem [shape: f32[1,256], index: 3, kind: input, shape index: {}]
  %s4 = inlined_call_operand.hbm [shape: f32[64,128], index: 4, kind: input, shape index: {}]
  %s5 = inlined_call_operand.vmem [shape: f32[1,128], index: 5, kind: input, shape index: {}]
  %s6 = inlined_call_operand.hbm [shape: f32[8,128], index: 6, kind: output, shape index: {}]
  %s7 = sld [smem:[#allocation0]]
  $region50: #{tpu_custom_call.1} parent=0
    _
  %s9 = ssub.s32 1, %s7
  %s10 = scalar_select 0, %s9, %s7
  $region1: #{tpu_custom_call.1} parent=0
    #allocation3 [shape = 'u8[32768]{0}', space=vmem, size = 0x8000, scoped, tag = 'input window, operand 0, single buffered']
    #allocation4 [shape = 's32[1]{0}', space=sflag, size = 0x4, scoped, tag = 'scoped memory for tpu_custom_call.1']
    #allocation5 [shape = 's32[1]{0}', space=sflag, size = 0x4, scoped, tag = 'scoped memory for tpu_custom_call.1']
    #allocation6 [shape = 'u8[131072]{0}', space=vmem, size = 0x20000, scoped, tag = 'input window, operand 1, single buffered']
    #allocation7 [shape = 's32[1]{0}', space=sflag, size = 0x4, scoped, tag = 'scoped memory for tpu_custom_call.1']
    #allocation8 [shape = 'u8[65536]{0}', space=vmem, size = 0x10000, scoped, tag = 'input window, operand 2, single buffered']
    #allocation9 [shape = 'u8[32768]{0}', space=vmem, size = 0x8000, scoped, tag = 'input window, operand 4, single buffered']
    #allocation10 [shape = 's32[1]{0}', space=sflag, size = 0x4, scoped, tag = 'scoped memory for tpu_custom_call.1']
    #allocation11 [shape = 'u8[4096]{0}', space=vmem, size = 0x1000, scoped, tag = 'output window, operand 0, single buffered']
    %11 = vsyncpa [#allocation4], 0
    %12 = vsyncpa [#allocation7], 0
    %13 = vsyncpa [#allocation10], 0
    %14 = vsyncpa [#allocation5], 0
    // Predicated region
    $region2: #{tpu_custom_call.1} parent=1 // pred_check
      _
    $region3: #{tpu_custom_call.1} parent=1 // pred_check_branch
      %16 = sbr.rel (0) target = $region5
    $region4: #{tpu_custom_call.1} parent=1 // pred_region
      %s18 = ssub.s32 1024, 1024
      %19 = vsyncadd [#allocation4], %s18
      %s20 = sshll.u32 [#allocation3], 4
      %s21 = int_to_ptr.vmem [resolvable:$true] %s20
      %26 = dma.hbm_to_vmem [thread:$0]  %s0, 1024, %s21, [#allocation4], 128, 128, 8
    $region5: #{tpu_custom_call.1} parent=1 // pred_fallthru
      _
    // Predicated region
    $region6: #{tpu_custom_call.1} parent=1 // pred_check
      _
    $region7: #{tpu_custom_call.1} parent=1 // pred_check_branch
      %28 = sbr.rel (0) target = $region9
    $region8: #{tpu_custom_call.1} parent=1 // pred_region
      %s30 = ssub.s32 4096, 4096
      %31 = vsyncadd [#allocation7], %s30
      %s32 = sshll.u32 [#allocation6], 4
      %s33 = int_to_ptr.vmem [resolvable:$true] %s32
      %38 = dma.hbm_to_vmem [thread:$0]  %s1, 4096, %s33, [#allocation7], 256, 256, 16
    $region9: #{tpu_custom_call.1} parent=1 // pred_fallthru
      _
    // Predicated region
    $region10: #{tpu_custom_call.1} parent=1 // pred_check
      _
    $region11: #{tpu_custom_call.1} parent=1 // pred_check_branch
      %40 = sbr.rel (0) target = $region13
    $region12: #{tpu_custom_call.1} parent=1 // pred_region
      %s42 = ssub.s32 2048, 2048
      %43 = vsyncadd [#allocation7], %s42
      %s44 = sshll.u32 [#allocation8], 4
      %s45 = int_to_ptr.vmem [resolvable:$true] %s44
      %50 = dma.hbm_to_vmem [thread:$0]  %s2, 2048, %s45, [#allocation7], 256, 256, 16
    $region13: #{tpu_custom_call.1} parent=1 // pred_fallthru
      _
    // Predicated region
    $region14: #{tpu_custom_call.1} parent=1 // pred_check
      _
    $region15: #{tpu_custom_call.1} parent=1 // pred_check_branch
      %52 = sbr.rel (0) target = $region17
    $region16: #{tpu_custom_call.1} parent=1 // pred_region
      _
    $region17: #{tpu_custom_call.1} parent=1 // pred_fallthru
      _
    // Predicated region
    $region18: #{tpu_custom_call.1} parent=1 // pred_check
      _
    $region19: #{tpu_custom_call.1} parent=1 // pred_check_branch
      %54 = sbr.rel (0) target = $region21
    $region20: #{tpu_custom_call.1} parent=1 // pred_region
      %s56 = ssub.s32 1024, 1024
      %57 = vsyncadd [#allocation10], %s56
      %s58 = sshll.u32 [#allocation9], 4
      %s59 = int_to_ptr.vmem [resolvable:$true] %s58
      %64 = dma.hbm_to_vmem [thread:$0]  %s4, 1024, %s59, [#allocation10], 128, 128, 8
    $region21: #{tpu_custom_call.1} parent=1 // pred_fallthru
      _
    // Predicated region
    $region22: #{tpu_custom_call.1} parent=1 // pred_check
      _
    $region23: #{tpu_custom_call.1} parent=1 // pred_check_branch
      %66 = sbr.rel (0) target = $region25
    $region24: #{tpu_custom_call.1} parent=1 // pred_region
      _
    $region25: #{tpu_custom_call.1} parent=1 // pred_fallthru
      _
    // Predicated region
    $region26: #{tpu_custom_call.1} parent=1 // pred_check
      _
    $region27: #{tpu_custom_call.1} parent=1 // pred_check_branch
      %68 = sbr.rel (0) target = $region29
    $region28: #{tpu_custom_call.1} parent=1 // pred_region
      %69 = dma.done [#allocation4], 1024
    $region29: #{tpu_custom_call.1} parent=1 // pred_fallthru
      _
    // Predicated region
    $region30: #{tpu_custom_call.1} parent=1 // pred_check
      _
    $region31: #{tpu_custom_call.1} parent=1 // pred_check_branch
      %71 = sbr.rel (0) target = $region33
    $region32: #{tpu_custom_call.1} parent=1 // pred_region
      %72 = dma.done [#allocation7], 4096
    $region33: #{tpu_custom_call.1} parent=1 // pred_fallthru
      _
    // Predicated region
    $region34: #{tpu_custom_call.1} parent=1 // pred_check
      _
    $region35: #{tpu_custom_call.1} parent=1 // pred_check_branch
      %74 = sbr.rel (0) target = $region37
    $region36: #{tpu_custom_call.1} parent=1 // pred_region
      %75 = dma.done [#allocation7], 2048
    $region37: #{tpu_custom_call.1} parent=1 // pred_fallthru
      _
    // Predicated region
    $region38: #{tpu_custom_call.1} parent=1 // pred_check
      _
    $region39: #{tpu_custom_call.1} parent=1 // pred_check_branch
      %77 = sbr.rel (0) target = $region41
    $region40: #{tpu_custom_call.1} parent=1 // pred_region
      %78 = dma.done [#allocation10], 1024
    $region41: #{tpu_custom_call.1} parent=1 // pred_fallthru
      _
    %v79 = vld [vmem:[#allocation3] sm:$0xff]
    %v80 = vld [vmem:[#allocation3 + $0x8] sm:$0xff]
    %v81 = vld [vmem:[#allocation3 + $0x10] sm:$0xff]
    %v82 = vld [vmem:[#allocation3 + $0x18] sm:$0xff]
    %v83 = vld [vmem:[#allocation3 + $0x20] sm:$0xff]
    %v84 = vld [vmem:[#allocation3 + $0x28] sm:$0xff]
    %v85 = vld [vmem:[#allocation3 + $0x30] sm:$0xff]
    %v86 = vld [vmem:[#allocation3 + $0x38] sm:$0xff]
    %v87 = vld [vmem:[#allocation6] sm:$0xff]
    %v88 = vld [vmem:[#allocation6 + $0x8] sm:$0xff]
    %v89 = vld [vmem:[#allocation6 + $0x10] sm:$0xff]
    %v90 = vld [vmem:[#allocation6 + $0x18] sm:$0xff]
    %v91 = vld [vmem:[#allocation6 + $0x20] sm:$0xff]
    %v92 = vld [vmem:[#allocation6 + $0x28] sm:$0xff]
    %v93 = vld [vmem:[#allocation6 + $0x30] sm:$0xff]
    %v94 = vld [vmem:[#allocation6 + $0x38] sm:$0xff]
    %v95 = vld [vmem:[#allocation6 + $0x40] sm:$0xff]
    %v96 = vld [vmem:[#allocation6 + $0x48] sm:$0xff]
    %v97 = vld [vmem:[#allocation6 + $0x50] sm:$0xff]
    %v98 = vld [vmem:[#allocation6 + $0x58] sm:$0xff]
    %v99 = vld [vmem:[#allocation6 + $0x60] sm:$0xff]
    %v100 = vld [vmem:[#allocation6 + $0x68] sm:$0xff]
    %v101 = vld [vmem:[#allocation6 + $0x70] sm:$0xff]
    %v102 = vld [vmem:[#allocation6 + $0x78] sm:$0xff]
    %v103 = vld [vmem:[#allocation6 + $0x80] sm:$0xff]
    %v104 = vld [vmem:[#allocation6 + $0x88] sm:$0xff]
    %v105 = vld [vmem:[#allocation6 + $0x90] sm:$0xff]
    %v106 = vld [vmem:[#allocation6 + $0x98] sm:$0xff]
    %v107 = vld [vmem:[#allocation6 + $0xa0] sm:$0xff]
    %v108 = vld [vmem:[#allocation6 + $0xa8] sm:$0xff]
    %v109 = vld [vmem:[#allocation6 + $0xb0] sm:$0xff]
    %v110 = vld [vmem:[#allocation6 + $0xb8] sm:$0xff]
    %v111 = vld [vmem:[#allocation6 + $0xc0] sm:$0xff]
    %v112 = vld [vmem:[#allocation6 + $0xc8] sm:$0xff]
    %v113 = vld [vmem:[#allocation6 + $0xd0] sm:$0xff]
    %v114 = vld [vmem:[#allocation6 + $0xd8] sm:$0xff]
    %v115 = vld [vmem:[#allocation6 + $0xe0] sm:$0xff]
    %v116 = vld [vmem:[#allocation6 + $0xe8] sm:$0xff]
    %v117 = vld [vmem:[#allocation6 + $0xf0] sm:$0xff]
    %v118 = vld [vmem:[#allocation6 + $0xf8] sm:$0xff]
    %v119 = vld [vmem:[%s3] sm:$0x3]
    %v121 = vlaneseq
    %v122 = vshrl.u32 %v121, 7
    %v123 = vsub.s32 0, %v122
    %v124 = vrot.slane %v119, %v123
    %v125 = vlaneseq
    %v126 = vshrl.u32 %v125, 7
    %v127 = vsub.s32 1, %v126
    %v128 = vrot.slane %v119, %v127
    %131 = vmatprep.subr.mxu0 %v88
    %132 = vmatpush1.msra.mxu0 %v87
    %133 = vmatprep.subr.mxu0 %v90
    %134 = vmatpush1.msra.mxu0 %v89
    %135 = vmatprep.subr.mxu0 %v92
    %136 = vmatpush1.msra.mxu0 %v91
    %137 = vmatprep.subr.mxu0 %v94
    %138 = vmatpush1.msra.mxu0 %v93
    %139 = vmatprep.subr.mxu0 %v96
    %140 = vmatpush1.msra.mxu0 %v95
    %141 = vmatprep.subr.mxu0 %v98
    %142 = vmatpush1.msra.mxu0 %v97
    %143 = vmatprep.subr.mxu0 %v100
    %144 = vmatpush1.msra.mxu0 %v99
    %145 = vmatprep.subr.mxu0 %v102
    %146 = vmatpush1.msra.mxu0 %v101
    %147 = vmatprep.subr.mxu0 %v104
    %148 = vmatpush1.msra.mxu0 %v103
    %149 = vmatprep.subr.mxu0 %v106
    %150 = vmatpush1.msra.mxu0 %v105
    %151 = vmatprep.subr.mxu0 %v108
    %152 = vmatpush1.msra.mxu0 %v107
    %153 = vmatprep.subr.mxu0 %v110
    %154 = vmatpush1.msra.mxu0 %v109
    %155 = vmatprep.subr.mxu0 %v112
    %156 = vmatpush1.msra.mxu0 %v111
    %157 = vmatprep.subr.mxu0 %v114
    %158 = vmatpush1.msra.mxu0 %v113
    %159 = vmatprep.subr.mxu0 %v116
    %160 = vmatpush1.msra.mxu0 %v115
    %161 = vmatprep.subr.mxu0 %v118
    %162 = vmatpush1.msra.mxu0 %v117
    %163 = vmatprep.subr.mxu0 0.0
    %164 = vmatpush1.msra.mxu0 0.0
    %165 = vmatprep.subr.mxu0 0.0
    %166 = vmatpush1.msra.mxu0 0.0
    %167 = vmatprep.subr.mxu0 0.0
    %168 = vmatpush1.msra.mxu0 0.0
    %169 = vmatprep.subr.mxu0 0.0
    %170 = vmatpush1.msra.mxu0 0.0
    %171 = vmatprep.subr.mxu0 0.0
    %172 = vmatpush1.msra.mxu0 0.0
    %173 = vmatprep.subr.mxu0 0.0
    %174 = vmatpush1.msra.mxu0 0.0
    %175 = vmatprep.subr.mxu0 0.0
    %176 = vmatpush1.msra.mxu0 0.0
    %177 = vmatprep.subr.mxu0 0.0
    %178 = vmatpush1.msra.mxu0 0.0
    %179 = vmatprep.subr.mxu0 0.0
    %180 = vmatpush1.msra.mxu0 0.0
    %181 = vmatprep.subr.mxu0 0.0
    %182 = vmatpush1.msra.mxu0 0.0
    %183 = vmatprep.subr.mxu0 0.0
    %184 = vmatpush1.msra.mxu0 0.0
    %185 = vmatprep.subr.mxu0 0.0
    %186 = vmatpush1.msra.mxu0 0.0
    %187 = vmatprep.subr.mxu0 0.0
    %188 = vmatpush1.msra.mxu0 0.0
    %189 = vmatprep.subr.mxu0 0.0
    %190 = vmatpush1.msra.mxu0 0.0
    %191 = vmatprep.subr.mxu0 0.0
    %192 = vmatpush1.msra.mxu0 0.0
    %193 = vmatprep.subr.mxu0 0.0
    %194 = vmatpush1.msra.mxu0 0.0
    %195 = vmatprep.mubr.f32.mxu0 0.0
    %196 = vmatmul.mubr.f32.gmra.mrb[0].mxu0 %v79
    %v197 = vpop.f32.mrb[0].mxu0
    %v198 = vadd.f32 %v124, %v197
    %v199 = vpop.f32.mrb[0].mxu0
    %v200 = vadd.f32 %v128, %v199
    %201 = vmatprep.mubr.f32.mxu0 0.0
    %202 = vmatmul.mubr.f32.gmra.mrb[0].mxu0 %v80
    %v203 = vpop.f32.mrb[0].mxu0
    %v204 = vadd.f32 %v124, %v203
    %v205 = vpop.f32.mrb[0].mxu0
    %v206 = vadd.f32 %v128, %v205
    %207 = vmatprep.mubr.f32.mxu0 0.0
    %208 = vmatmul.mubr.f32.gmra.mrb[0].mxu0 %v81
    %v209 = vpop.f32.mrb[0].mxu0
    %v210 = vadd.f32 %v124, %v209
    %v211 = vpop.f32.mrb[0].mxu0
    %v212 = vadd.f32 %v128, %v211
    %213 = vmatprep.mubr.f32.mxu0 0.0
    %214 = vmatmul.mubr.f32.gmra.mrb[0].mxu0 %v82
    %v215 = vpop.f32.mrb[0].mxu0
    %v216 = vadd.f32 %v124, %v215
    %v217 = vpop.f32.mrb[0].mxu0
    %v218 = vadd.f32 %v128, %v217
    %219 = vmatprep.mubr.f32.mxu0 0.0
    %220 = vmatmul.mubr.f32.gmra.mrb[0].mxu0 %v83
    %v221 = vpop.f32.mrb[0].mxu0
    %v222 = vadd.f32 %v124, %v221
    %v223 = vpop.f32.mrb[0].mxu0
    %v224 = vadd.f32 %v128, %v223
    %225 = vmatprep.mubr.f32.mxu0 0.0
    %226 = vmatmul.mubr.f32.gmra.mrb[0].mxu0 %v84
    %v227 = vpop.f32.mrb[0].mxu0
    %v228 = vadd.f32 %v124, %v227
    %v229 = vpop.f32.mrb[0].mxu0
    %v230 = vadd.f32 %v128, %v229
    %231 = vmatprep.mubr.f32.mxu0 0.0
    %232 = vmatmul.mubr.f32.gmra.mrb[0].mxu0 %v85
    %v233 = vpop.f32.mrb[0].mxu0
    %v234 = vadd.f32 %v124, %v233
    %v235 = vpop.f32.mrb[0].mxu0
    %v236 = vadd.f32 %v128, %v235
    %237 = vmatprep.mubr.f32.mxu0 0.0
    %238 = vmatmul.mubr.f32.gmra.mrb[0].mxu0 %v86
    %v239 = vpop.f32.mrb[0].mxu0
    %v240 = vadd.f32 %v124, %v239
    %v241 = vpop.f32.mrb[0].mxu0
    %v242 = vadd.f32 %v128, %v241
    %243 = vdwg.mxu0
    %244 = vst [vmem:[#allocation2] sm:$0xff] %v198
    %245 = vst [vmem:[#allocation2 + $0x8] sm:$0xff] %v200
    %246 = vst [vmem:[#allocation2 + $0x10] sm:$0xff] %v204
    %247 = vst [vmem:[#allocation2 + $0x18] sm:$0xff] %v206
    %248 = vst [vmem:[#allocation2 + $0x20] sm:$0xff] %v210
    %249 = vst [vmem:[#allocation2 + $0x28] sm:$0xff] %v212
    %250 = vst [vmem:[#allocation2 + $0x30] sm:$0xff] %v216
    %251 = vst [vmem:[#allocation2 + $0x38] sm:$0xff] %v218
    %252 = vst [vmem:[#allocation2 + $0x40] sm:$0xff] %v222
    %253 = vst [vmem:[#allocation2 + $0x48] sm:$0xff] %v224
    %254 = vst [vmem:[#allocation2 + $0x50] sm:$0xff] %v228
    %255 = vst [vmem:[#allocation2 + $0x58] sm:$0xff] %v230
    %256 = vst [vmem:[#allocation2 + $0x60] sm:$0xff] %v234
    %257 = vst [vmem:[#allocation2 + $0x68] sm:$0xff] %v236
    %258 = vst [vmem:[#allocation2 + $0x70] sm:$0xff] %v240
    %259 = vst [vmem:[#allocation2 + $0x78] sm:$0xff] %v242
    %v260 = vld [vmem:[#allocation2] sm:$0xff]
    %v261 = vld [vmem:[#allocation2 + $0x8] sm:$0xff]
    %v262 = vld [vmem:[#allocation8] sm:$0xff]
    %v263 = vld [vmem:[#allocation8 + $0x8] sm:$0xff]
    %v264 = vld [vmem:[#allocation8 + $0x10] sm:$0xff]
    %v265 = vld [vmem:[#allocation8 + $0x18] sm:$0xff]
    %v266 = vld [vmem:[#allocation8 + $0x20] sm:$0xff]
    %v267 = vld [vmem:[#allocation8 + $0x28] sm:$0xff]
    %v268 = vld [vmem:[#allocation8 + $0x30] sm:$0xff]
    %v269 = vld [vmem:[#allocation8 + $0x38] sm:$0xff]
    %v270 = vld [vmem:[#allocation8 + $0x40] sm:$0xff]
    %v271 = vld [vmem:[#allocation8 + $0x48] sm:$0xff]
    %v272 = vld [vmem:[#allocation8 + $0x50] sm:$0xff]
    %v273 = vld [vmem:[#allocation8 + $0x58] sm:$0xff]
    %v274 = vld [vmem:[#allocation8 + $0x60] sm:$0xff]
    %v275 = vld [vmem:[#allocation8 + $0x68] sm:$0xff]
    %v276 = vld [vmem:[#allocation8 + $0x70] sm:$0xff]
    %v277 = vld [vmem:[#allocation8 + $0x78] sm:$0xff]
    %vm278 = vcmask 523264
    %v280 = vsel %vm278, 0.0, 0
    %282 = vmatprep.subr.mxu0 %v263
    %283 = vmatpush1.msra.mxu0 %v262
    %284 = vmatprep.subr.mxu0 %v265
    %285 = vmatpush1.msra.mxu0 %v264
    %286 = vmatprep.subr.mxu0 %v267
    %287 = vmatpush1.msra.mxu0 %v266
    %288 = vmatprep.subr.mxu0 %v269
    %289 = vmatpush1.msra.mxu0 %v268
    %290 = vmatprep.subr.mxu0 %v271
    %291 = vmatpush1.msra.mxu0 %v270
    %292 = vmatprep.subr.mxu0 %v273
    %293 = vmatpush1.msra.mxu0 %v272
    %294 = vmatprep.subr.mxu0 %v275
    %295 = vmatpush1.msra.mxu0 %v274
    %296 = vmatprep.subr.mxu0 %v277
    %297 = vmatpush1.msra.mxu0 %v276
    %298 = vmatprep.subr.mxu0 0.0
    %299 = vmatpush1.msra.mxu0 0.0
    %300 = vmatprep.subr.mxu0 0.0
    %301 = vmatpush1.msra.mxu0 0.0
    %302 = vmatprep.subr.mxu0 0.0
    %303 = vmatpush1.msra.mxu0 0.0
    %304 = vmatprep.subr.mxu0 0.0
    %305 = vmatpush1.msra.mxu0 0.0
    %306 = vmatprep.subr.mxu0 0.0
    %307 = vmatpush1.msra.mxu0 0.0
    %308 = vmatprep.subr.mxu0 0.0
    %309 = vmatpush1.msra.mxu0 0.0
    %310 = vmatprep.subr.mxu0 0.0
    %311 = vmatpush1.msra.mxu0 0.0
    %312 = vmatprep.subr.mxu0 0.0
    %313 = vmatpush1.msra.mxu0 0.0
    %314 = vmatprep.subr.mxu0 0.0
    %315 = vmatpush1.msra.mxu0 0.0
    %316 = vmatprep.subr.mxu0 0.0
    %317 = vmatpush1.msra.mxu0 0.0
    %318 = vmatprep.subr.mxu0 0.0
    %319 = vmatpush1.msra.mxu0 0.0
    %320 = vmatprep.subr.mxu0 0.0
    %321 = vmatpush1.msra.mxu0 0.0
    %322 = vmatprep.subr.mxu0 0.0
    %323 = vmatpush1.msra.mxu0 0.0
    %324 = vmatprep.subr.mxu0 0.0
    %325 = vmatpush1.msra.mxu0 0.0
    %326 = vmatprep.subr.mxu0 0.0
    %327 = vmatpush1.msra.mxu0 0.0
    %328 = vmatprep.subr.mxu0 0.0
    %329 = vmatpush1.msra.mxu0 0.0
    %330 = vmatprep.subr.mxu0 0.0
    %331 = vmatpush1.msra.mxu0 0.0
    %332 = vmatprep.subr.mxu0 0.0
    %333 = vmatpush1.msra.mxu0 0.0
    %334 = vmatprep.subr.mxu0 0.0
    %335 = vmatpush1.msra.mxu0 0.0
    %336 = vmatprep.subr.mxu0 0.0
    %337 = vmatpush1.msra.mxu0 0.0
    %338 = vmatprep.subr.mxu0 0.0
    %339 = vmatpush1.msra.mxu0 0.0
    %340 = vmatprep.subr.mxu0 0.0
    %341 = vmatpush1.msra.mxu0 0.0
    %342 = vmatprep.subr.mxu0 0.0
    %343 = vmatpush1.msra.mxu0 0.0
    %344 = vmatprep.subr.mxu0 0.0
    %345 = vmatpush1.msra.mxu0 0.0
    %346 = vmatprep.mubr.f32.mxu0 0.0
    %347 = vmatmul.mubr.f32.gmra.mrb[0].mxu0 %v280
    %v348 = vpop.f32.mrb[0].mxu0
    %v349 = vadd.f32 0.0, %v348
    %v350 = vpop.f32.mrb[0].mxu0
    %v351 = vadd.f32 0.0, %v350
    %352 = vdwg.mxu0
    %v353 = vadd.f32 %v260, %v349
    %v354 = vadd.f32 %v261, %v351
    %v355 = vxor.u32 %v353, 2147483648
    %v356 = vxor.u32 %v354, 2147483648
    %v357 = vmul.f32 %v355, 1.442695
    %v358 = vpow.pop %v357
    %v359 = vmul.f32 %v356, 1.442695
    %v360 = vpow.pop %v359
    %v361 = vadd.f32 %v358, 1.0
    %v362 = vadd.f32 %v360, 1.0
    %v363 = vrcp.pop %v361
    %v364 = vmul.f32 1.0, %v363
    %v365 = vrcp.pop %v362
    %v366 = vmul.f32 1.0, %v365
    %v367 = vtanh.pop %v354
    %v368 = vmul.f32 %v364, 0.0
    %v369 = vmul.f32 %v364, %v367
    %371 = vrot.lane.b32.xlu0 %v369, 64
    %v372 = vpop.permute.xlu0 %371
    %v374 = vadd.f32 %v368, %v372
    %v375 = vtanh.pop %v374
    %v376 = vmul.f32 %v366, %v375
    %v377 = vld [vmem:[#allocation2 + $0x10] sm:$0xff]
    %v378 = vld [vmem:[#allocation2 + $0x18] sm:$0xff]
    %380 = vrot.lane.b32.xlu0 %v376, 64
    %v381 = vpop.permute.xlu0 %380
    %v382 = vsel %vm278, %v381, 0
    %384 = vmatprep.subr.mxu0 %v263
    %385 = vmatpush1.msra.mxu0 %v262
    %386 = vmatprep.subr.mxu0 %v265
    %387 = vmatpush1.msra.mxu0 %v264
    %388 = vmatprep.subr.mxu0 %v267
    %389 = vmatpush1.msra.mxu0 %v266
    %390 = vmatprep.subr.mxu0 %v269
    %391 = vmatpush1.msra.mxu0 %v268
    %392 = vmatprep.subr.mxu0 %v271
    %393 = vmatpush1.msra.mxu0 %v270
    %394 = vmatprep.subr.mxu0 %v273
    %395 = vmatpush1.msra.mxu0 %v272
    %396 = vmatprep.subr.mxu0 %v275
    %397 = vmatpush1.msra.mxu0 %v274
    %398 = vmatprep.subr.mxu0 %v277
    %399 = vmatpush1.msra.mxu0 %v276
    %400 = vmatprep.subr.mxu0 0.0
    %401 = vmatpush1.msra.mxu0 0.0
    %402 = vmatprep.subr.mxu0 0.0
    %403 = vmatpush1.msra.mxu0 0.0
    %404 = vmatprep.subr.mxu0 0.0
    %405 = vmatpush1.msra.mxu0 0.0
    %406 = vmatprep.subr.mxu0 0.0
    %407 = vmatpush1.msra.mxu0 0.0
    %408 = vmatprep.subr.mxu0 0.0
    %409 = vmatpush1.msra.mxu0 0.0
    %410 = vmatprep.subr.mxu0 0.0
    %411 = vmatpush1.msra.mxu0 0.0
    %412 = vmatprep.subr.mxu0 0.0
    %413 = vmatpush1.msra.mxu0 0.0
    %414 = vmatprep.subr.mxu0 0.0
    %415 = vmatpush1.msra.mxu0 0.0
    %416 = vmatprep.subr.mxu0 0.0
    %417 = vmatpush1.msra.mxu0 0.0
    %418 = vmatprep.subr.mxu0 0.0
    %419 = vmatpush1.msra.mxu0 0.0
    %420 = vmatprep.subr.mxu0 0.0
    %421 = vmatpush1.msra.mxu0 0.0
    %422 = vmatprep.subr.mxu0 0.0
    %423 = vmatpush1.msra.mxu0 0.0
    %424 = vmatprep.subr.mxu0 0.0
    %425 = vmatpush1.msra.mxu0 0.0
    %426 = vmatprep.subr.mxu0 0.0
    %427 = vmatpush1.msra.mxu0 0.0
    %428 = vmatprep.subr.mxu0 0.0
    %429 = vmatpush1.msra.mxu0 0.0
    %430 = vmatprep.subr.mxu0 0.0
    %431 = vmatpush1.msra.mxu0 0.0
    %432 = vmatprep.subr.mxu0 0.0
    %433 = vmatpush1.msra.mxu0 0.0
    %434 = vmatprep.subr.mxu0 0.0
    %435 = vmatpush1.msra.mxu0 0.0
    %436 = vmatprep.subr.mxu0 0.0
    %437 = vmatpush1.msra.mxu0 0.0
    %438 = vmatprep.subr.mxu0 0.0
    %439 = vmatpush1.msra.mxu0 0.0
    %440 = vmatprep.subr.mxu0 0.0
    %441 = vmatpush1.msra.mxu0 0.0
    %442 = vmatprep.subr.mxu0 0.0
    %443 = vmatpush1.msra.mxu0 0.0
    %444 = vmatprep.subr.mxu0 0.0
    %445 = vmatpush1.msra.mxu0 0.0
    %446 = vmatprep.subr.mxu0 0.0
    %447 = vmatpush1.msra.mxu0 0.0
    %448 = vmatprep.mubr.f32.mxu0 0.0
    %449 = vmatmul.mubr.f32.gmra.mrb[0].mxu0 %v382
    %v450 = vpop.f32.mrb[0].mxu0
    %v451 = vadd.f32 0.0, %v450
    %v452 = vpop.f32.mrb[0].mxu0
    %v453 = vadd.f32 0.0, %v452
    %454 = vdwg.mxu0
    %v455 = vadd.f32 %v377, %v451
    %v456 = vadd.f32 %v378, %v453
    %v457 = vxor.u32 %v455, 2147483648
    %v458 = vxor.u32 %v456, 2147483648
    %v459 = vmul.f32 %v457, 1.442695
    %v460 = vpow.pop %v459
    %v461 = vmul.f32 %v458, 1.442695
    %v462 = vpow.pop %v461
    %v463 = vadd.f32 %v460, 1.0
    %v464 = vadd.f32 %v462, 1.0
    %v465 = vrcp.pop %v463
    %v466 = vmul.f32 1.0, %v465
    %v467 = vrcp.pop %v464
    %v468 = vmul.f32 1.0, %v467
    %v469 = vtanh.pop %v456
    %v470 = vmul.f32 %v466, %v374
    %v471 = vmul.f32 %v466, %v469
    %473 = vrot.lane.b32.xlu0 %v471, 64
    %v474 = vpop.permute.xlu0 %473
    %v476 = vadd.f32 %v470, %v474
    %v477 = vtanh.pop %v476
    %v478 = vmul.f32 %v468, %v477
    %v479 = vld [vmem:[#allocation2 + $0x20] sm:$0xff]
    %v480 = vld [vmem:[#allocation2 + $0x28] sm:$0xff]
    %482 = vrot.lane.b32.xlu0 %v478, 64
    %v483 = vpop.permute.xlu0 %482
    %v484 = vsel %vm278, %v483, 0
    %486 = vmatprep.subr.mxu0 %v263
    %487 = vmatpush1.msra.mxu0 %v262
    %488 = vmatprep.subr.mxu0 %v265
    %489 = vmatpush1.msra.mxu0 %v264
    %490 = vmatprep.subr.mxu0 %v267
    %491 = vmatpush1.msra.mxu0 %v266
    %492 = vmatprep.subr.mxu0 %v269
    %493 = vmatpush1.msra.mxu0 %v268
    %494 = vmatprep.subr.mxu0 %v271
    %495 = vmatpush1.msra.mxu0 %v270
    %496 = vmatprep.subr.mxu0 %v273
    %497 = vmatpush1.msra.mxu0 %v272
    %498 = vmatprep.subr.mxu0 %v275
    %499 = vmatpush1.msra.mxu0 %v274
    %500 = vmatprep.subr.mxu0 %v277
    %501 = vmatpush1.msra.mxu0 %v276
    %502 = vmatprep.subr.mxu0 0.0
    %503 = vmatpush1.msra.mxu0 0.0
    %504 = vmatprep.subr.mxu0 0.0
    %505 = vmatpush1.msra.mxu0 0.0
    %506 = vmatprep.subr.mxu0 0.0
    %507 = vmatpush1.msra.mxu0 0.0
    %508 = vmatprep.subr.mxu0 0.0
    %509 = vmatpush1.msra.mxu0 0.0
    %510 = vmatprep.subr.mxu0 0.0
    %511 = vmatpush1.msra.mxu0 0.0
    %512 = vmatprep.subr.mxu0 0.0
    %513 = vmatpush1.msra.mxu0 0.0
    %514 = vmatprep.subr.mxu0 0.0
    %515 = vmatpush1.msra.mxu0 0.0
    %516 = vmatprep.subr.mxu0 0.0
    %517 = vmatpush1.msra.mxu0 0.0
    %518 = vmatprep.subr.mxu0 0.0
    %519 = vmatpush1.msra.mxu0 0.0
    %520 = vmatprep.subr.mxu0 0.0
    %521 = vmatpush1.msra.mxu0 0.0
    %522 = vmatprep.subr.mxu0 0.0
    %523 = vmatpush1.msra.mxu0 0.0
    %524 = vmatprep.subr.mxu0 0.0
    %525 = vmatpush1.msra.mxu0 0.0
    %526 = vmatprep.subr.mxu0 0.0
    %527 = vmatpush1.msra.mxu0 0.0
    %528 = vmatprep.subr.mxu0 0.0
    %529 = vmatpush1.msra.mxu0 0.0
    %530 = vmatprep.subr.mxu0 0.0
    %531 = vmatpush1.msra.mxu0 0.0
    %532 = vmatprep.subr.mxu0 0.0
    %533 = vmatpush1.msra.mxu0 0.0
    %534 = vmatprep.subr.mxu0 0.0
    %535 = vmatpush1.msra.mxu0 0.0
    %536 = vmatprep.subr.mxu0 0.0
    %537 = vmatpush1.msra.mxu0 0.0
    %538 = vmatprep.subr.mxu0 0.0
    %539 = vmatpush1.msra.mxu0 0.0
    %540 = vmatprep.subr.mxu0 0.0
    %541 = vmatpush1.msra.mxu0 0.0
    %542 = vmatprep.subr.mxu0 0.0
    %543 = vmatpush1.msra.mxu0 0.0
    %544 = vmatprep.subr.mxu0 0.0
    %545 = vmatpush1.msra.mxu0 0.0
    %546 = vmatprep.subr.mxu0 0.0
    %547 = vmatpush1.msra.mxu0 0.0
    %548 = vmatprep.subr.mxu0 0.0
    %549 = vmatpush1.msra.mxu0 0.0
    %550 = vmatprep.mubr.f32.mxu0 0.0
    %551 = vmatmul.mubr.f32.gmra.mrb[0].mxu0 %v484
    %v552 = vpop.f32.mrb[0].mxu0
    %v553 = vadd.f32 0.0, %v552
    %v554 = vpop.f32.mrb[0].mxu0
    %v555 = vadd.f32 0.0, %v554
    %556 = vdwg.mxu0
    %v557 = vadd.f32 %v479, %v553
    %v558 = vadd.f32 %v480, %v555
    %v559 = vxor.u32 %v557, 2147483648
    %v560 = vxor.u32 %v558, 2147483648
    %v561 = vmul.f32 %v559, 1.442695
    %v562 = vpow.pop %v561
    %v563 = vmul.f32 %v560, 1.442695
    %v564 = vpow.pop %v563
    %v565 = vadd.f32 %v562, 1.0
    %v566 = vadd.f32 %v564, 1.0
    %v567 = vrcp.pop %v565
    %v568 = vmul.f32 1.0, %v567
    %v569 = vrcp.pop %v566
    %v570 = vmul.f32 1.0, %v569
    %v571 = vtanh.pop %v558
    %v572 = vmul.f32 %v568, %v476
    %v573 = vmul.f32 %v568, %v571
    %575 = vrot.lane.b32.xlu0 %v573, 64
    %v576 = vpop.permute.xlu0 %575
    %v578 = vadd.f32 %v572, %v576
    %v579 = vtanh.pop %v578
    %v580 = vmul.f32 %v570, %v579
    %v581 = vld [vmem:[#allocation2 + $0x30] sm:$0xff]
    %v582 = vld [vmem:[#allocation2 + $0x38] sm:$0xff]
    %584 = vrot.lane.b32.xlu0 %v580, 64
    %v585 = vpop.permute.xlu0 %584
    %v586 = vsel %vm278, %v585, 0
    %588 = vmatprep.subr.mxu0 %v263
    %589 = vmatpush1.msra.mxu0 %v262
    %590 = vmatprep.subr.mxu0 %v265
    %591 = vmatpush1.msra.mxu0 %v264
    %592 = vmatprep.subr.mxu0 %v267
    %593 = vmatpush1.msra.mxu0 %v266
    %594 = vmatprep.subr.mxu0 %v269
    %595 = vmatpush1.msra.mxu0 %v268
    %596 = vmatprep.subr.mxu0 %v271
    %597 = vmatpush1.msra.mxu0 %v270
    %598 = vmatprep.subr.mxu0 %v273
    %599 = vmatpush1.msra.mxu0 %v272
    %600 = vmatprep.subr.mxu0 %v275
    %601 = vmatpush1.msra.mxu0 %v274
    %602 = vmatprep.subr.mxu0 %v277
    %603 = vmatpush1.msra.mxu0 %v276
    %604 = vmatprep.subr.mxu0 0.0
    %605 = vmatpush1.msra.mxu0 0.0
    %606 = vmatprep.subr.mxu0 0.0
    %607 = vmatpush1.msra.mxu0 0.0
    %608 = vmatprep.subr.mxu0 0.0
    %609 = vmatpush1.msra.mxu0 0.0
    %610 = vmatprep.subr.mxu0 0.0
    %611 = vmatpush1.msra.mxu0 0.0
    %612 = vmatprep.subr.mxu0 0.0
    %613 = vmatpush1.msra.mxu0 0.0
    %614 = vmatprep.subr.mxu0 0.0
    %615 = vmatpush1.msra.mxu0 0.0
    %616 = vmatprep.subr.mxu0 0.0
    %617 = vmatpush1.msra.mxu0 0.0
    %618 = vmatprep.subr.mxu0 0.0
    %619 = vmatpush1.msra.mxu0 0.0
    %620 = vmatprep.subr.mxu0 0.0
    %621 = vmatpush1.msra.mxu0 0.0
    %622 = vmatprep.subr.mxu0 0.0
    %623 = vmatpush1.msra.mxu0 0.0
    %624 = vmatprep.subr.mxu0 0.0
    %625 = vmatpush1.msra.mxu0 0.0
    %626 = vmatprep.subr.mxu0 0.0
    %627 = vmatpush1.msra.mxu0 0.0
    %628 = vmatprep.subr.mxu0 0.0
    %629 = vmatpush1.msra.mxu0 0.0
    %630 = vmatprep.subr.mxu0 0.0
    %631 = vmatpush1.msra.mxu0 0.0
    %632 = vmatprep.subr.mxu0 0.0
    %633 = vmatpush1.msra.mxu0 0.0
    %634 = vmatprep.subr.mxu0 0.0
    %635 = vmatpush1.msra.mxu0 0.0
    %636 = vmatprep.subr.mxu0 0.0
    %637 = vmatpush1.msra.mxu0 0.0
    %638 = vmatprep.subr.mxu0 0.0
    %639 = vmatpush1.msra.mxu0 0.0
    %640 = vmatprep.subr.mxu0 0.0
    %641 = vmatpush1.msra.mxu0 0.0
    %642 = vmatprep.subr.mxu0 0.0
    %643 = vmatpush1.msra.mxu0 0.0
    %644 = vmatprep.subr.mxu0 0.0
    %645 = vmatpush1.msra.mxu0 0.0
    %646 = vmatprep.subr.mxu0 0.0
    %647 = vmatpush1.msra.mxu0 0.0
    %648 = vmatprep.subr.mxu0 0.0
    %649 = vmatpush1.msra.mxu0 0.0
    %650 = vmatprep.subr.mxu0 0.0
    %651 = vmatpush1.msra.mxu0 0.0
    %652 = vmatprep.mubr.f32.mxu0 0.0
    %653 = vmatmul.mubr.f32.gmra.mrb[0].mxu0 %v586
    %v654 = vpop.f32.mrb[0].mxu0
    %v655 = vadd.f32 0.0, %v654
    %v656 = vpop.f32.mrb[0].mxu0
    %v657 = vadd.f32 0.0, %v656
    %658 = vdwg.mxu0
    %v659 = vadd.f32 %v581, %v655
    %v660 = vadd.f32 %v582, %v657
    %v661 = vxor.u32 %v659, 2147483648
    %v662 = vxor.u32 %v660, 2147483648
    %v663 = vmul.f32 %v661, 1.442695
    %v664 = vpow.pop %v663
    %v665 = vmul.f32 %v662, 1.442695
    %v666 = vpow.pop %v665
    %v667 = vadd.f32 %v664, 1.0
    %v668 = vadd.f32 %v666, 1.0
    %v669 = vrcp.pop %v667
    %v670 = vmul.f32 1.0, %v669
    %v671 = vrcp.pop %v668
    %v672 = vmul.f32 1.0, %v671
    %v673 = vtanh.pop %v660
    %v674 = vmul.f32 %v670, %v578
    %v675 = vmul.f32 %v670, %v673
    %677 = vrot.lane.b32.xlu0 %v675, 64
    %v678 = vpop.permute.xlu0 %677
    %v680 = vadd.f32 %v674, %v678
    %v681 = vtanh.pop %v680
    %v682 = vmul.f32 %v672, %v681
    %v683 = vld [vmem:[#allocation2 + $0x40] sm:$0xff]
    %v684 = vld [vmem:[#allocation2 + $0x48] sm:$0xff]
    %686 = vrot.lane.b32.xlu0 %v682, 64
    %v687 = vpop.permute.xlu0 %686
    %v688 = vsel %vm278, %v687, 0
    %690 = vmatprep.subr.mxu0 %v263
    %691 = vmatpush1.msra.mxu0 %v262
    %692 = vmatprep.subr.mxu0 %v265
    %693 = vmatpush1.msra.mxu0 %v264
    %694 = vmatprep.subr.mxu0 %v267
    %695 = vmatpush1.msra.mxu0 %v266
    %696 = vmatprep.subr.mxu0 %v269
    %697 = vmatpush1.msra.mxu0 %v268
    %698 = vmatprep.subr.mxu0 %v271
    %699 = vmatpush1.msra.mxu0 %v270
    %700 = vmatprep.subr.mxu0 %v273
    %701 = vmatpush1.msra.mxu0 %v272
    %702 = vmatprep.subr.mxu0 %v275
    %703 = vmatpush1.msra.mxu0 %v274
    %704 = vmatprep.subr.mxu0 %v277
    %705 = vmatpush1.msra.mxu0 %v276
    %706 = vmatprep.subr.mxu0 0.0
    %707 = vmatpush1.msra.mxu0 0.0
    %708 = vmatprep.subr.mxu0 0.0
    %709 = vmatpush1.msra.mxu0 0.0
    %710 = vmatprep.subr.mxu0 0.0
    %711 = vmatpush1.msra.mxu0 0.0
    %712 = vmatprep.subr.mxu0 0.0
    %713 = vmatpush1.msra.mxu0 0.0
    %714 = vmatprep.subr.mxu0 0.0
    %715 = vmatpush1.msra.mxu0 0.0
    %716 = vmatprep.subr.mxu0 0.0
    %717 = vmatpush1.msra.mxu0 0.0
    %718 = vmatprep.subr.mxu0 0.0
    %719 = vmatpush1.msra.mxu0 0.0
    %720 = vmatprep.subr.mxu0 0.0
    %721 = vmatpush1.msra.mxu0 0.0
    %722 = vmatprep.subr.mxu0 0.0
    %723 = vmatpush1.msra.mxu0 0.0
    %724 = vmatprep.subr.mxu0 0.0
    %725 = vmatpush1.msra.mxu0 0.0
    %726 = vmatprep.subr.mxu0 0.0
    %727 = vmatpush1.msra.mxu0 0.0
    %728 = vmatprep.subr.mxu0 0.0
    %729 = vmatpush1.msra.mxu0 0.0
    %730 = vmatprep.subr.mxu0 0.0
    %731 = vmatpush1.msra.mxu0 0.0
    %732 = vmatprep.subr.mxu0 0.0
    %733 = vmatpush1.msra.mxu0 0.0
    %734 = vmatprep.subr.mxu0 0.0
    %735 = vmatpush1.msra.mxu0 0.0
    %736 = vmatprep.subr.mxu0 0.0
    %737 = vmatpush1.msra.mxu0 0.0
    %738 = vmatprep.subr.mxu0 0.0
    %739 = vmatpush1.msra.mxu0 0.0
    %740 = vmatprep.subr.mxu0 0.0
    %741 = vmatpush1.msra.mxu0 0.0
    %742 = vmatprep.subr.mxu0 0.0
    %743 = vmatpush1.msra.mxu0 0.0
    %744 = vmatprep.subr.mxu0 0.0
    %745 = vmatpush1.msra.mxu0 0.0
    %746 = vmatprep.subr.mxu0 0.0
    %747 = vmatpush1.msra.mxu0 0.0
    %748 = vmatprep.subr.mxu0 0.0
    %749 = vmatpush1.msra.mxu0 0.0
    %750 = vmatprep.subr.mxu0 0.0
    %751 = vmatpush1.msra.mxu0 0.0
    %752 = vmatprep.subr.mxu0 0.0
    %753 = vmatpush1.msra.mxu0 0.0
    %754 = vmatprep.mubr.f32.mxu0 0.0
    %755 = vmatmul.mubr.f32.gmra.mrb[0].mxu0 %v688
    %v756 = vpop.f32.mrb[0].mxu0
    %v757 = vadd.f32 0.0, %v756
    %v758 = vpop.f32.mrb[0].mxu0
    %v759 = vadd.f32 0.0, %v758
    %760 = vdwg.mxu0
    %v761 = vadd.f32 %v683, %v757
    %v762 = vadd.f32 %v684, %v759
    %v763 = vxor.u32 %v761, 2147483648
    %v764 = vxor.u32 %v762, 2147483648
    %v765 = vmul.f32 %v763, 1.442695
    %v766 = vpow.pop %v765
    %v767 = vmul.f32 %v764, 1.442695
    %v768 = vpow.pop %v767
    %v769 = vadd.f32 %v766, 1.0
    %v770 = vadd.f32 %v768, 1.0
    %v771 = vrcp.pop %v769
    %v772 = vmul.f32 1.0, %v771
    %v773 = vrcp.pop %v770
    %v774 = vmul.f32 1.0, %v773
    %v775 = vtanh.pop %v762
    %v776 = vmul.f32 %v772, %v680
    %v777 = vmul.f32 %v772, %v775
    %779 = vrot.lane.b32.xlu0 %v777, 64
    %v780 = vpop.permute.xlu0 %779
    %v782 = vadd.f32 %v776, %v780
    %v783 = vtanh.pop %v782
    %v784 = vmul.f32 %v774, %v783
    %v785 = vld [vmem:[#allocation2 + $0x50] sm:$0xff]
    %v786 = vld [vmem:[#allocation2 + $0x58] sm:$0xff]
    %788 = vrot.lane.b32.xlu0 %v784, 64
    %v789 = vpop.permute.xlu0 %788
    %v790 = vsel %vm278, %v789, 0
    %792 = vmatprep.subr.mxu0 %v263
    %793 = vmatpush1.msra.mxu0 %v262
    %794 = vmatprep.subr.mxu0 %v265
    %795 = vmatpush1.msra.mxu0 %v264
    %796 = vmatprep.subr.mxu0 %v267
    %797 = vmatpush1.msra.mxu0 %v266
    %798 = vmatprep.subr.mxu0 %v269
    %799 = vmatpush1.msra.mxu0 %v268
    %800 = vmatprep.subr.mxu0 %v271
    %801 = vmatpush1.msra.mxu0 %v270
    %802 = vmatprep.subr.mxu0 %v273
    %803 = vmatpush1.msra.mxu0 %v272
    %804 = vmatprep.subr.mxu0 %v275
    %805 = vmatpush1.msra.mxu0 %v274
    %806 = vmatprep.subr.mxu0 %v277
    %807 = vmatpush1.msra.mxu0 %v276
    %808 = vmatprep.subr.mxu0 0.0
    %809 = vmatpush1.msra.mxu0 0.0
    %810 = vmatprep.subr.mxu0 0.0
    %811 = vmatpush1.msra.mxu0 0.0
    %812 = vmatprep.subr.mxu0 0.0
    %813 = vmatpush1.msra.mxu0 0.0
    %814 = vmatprep.subr.mxu0 0.0
    %815 = vmatpush1.msra.mxu0 0.0
    %816 = vmatprep.subr.mxu0 0.0
    %817 = vmatpush1.msra.mxu0 0.0
    %818 = vmatprep.subr.mxu0 0.0
    %819 = vmatpush1.msra.mxu0 0.0
    %820 = vmatprep.subr.mxu0 0.0
    %821 = vmatpush1.msra.mxu0 0.0
    %822 = vmatprep.subr.mxu0 0.0
    %823 = vmatpush1.msra.mxu0 0.0
    %824 = vmatprep.subr.mxu0 0.0
    %825 = vmatpush1.msra.mxu0 0.0
    %826 = vmatprep.subr.mxu0 0.0
    %827 = vmatpush1.msra.mxu0 0.0
    %828 = vmatprep.subr.mxu0 0.0
    %829 = vmatpush1.msra.mxu0 0.0
    %830 = vmatprep.subr.mxu0 0.0
    %831 = vmatpush1.msra.mxu0 0.0
    %832 = vmatprep.subr.mxu0 0.0
    %833 = vmatpush1.msra.mxu0 0.0
    %834 = vmatprep.subr.mxu0 0.0
    %835 = vmatpush1.msra.mxu0 0.0
    %836 = vmatprep.subr.mxu0 0.0
    %837 = vmatpush1.msra.mxu0 0.0
    %838 = vmatprep.subr.mxu0 0.0
    %839 = vmatpush1.msra.mxu0 0.0
    %840 = vmatprep.subr.mxu0 0.0
    %841 = vmatpush1.msra.mxu0 0.0
    %842 = vmatprep.subr.mxu0 0.0
    %843 = vmatpush1.msra.mxu0 0.0
    %844 = vmatprep.subr.mxu0 0.0
    %845 = vmatpush1.msra.mxu0 0.0
    %846 = vmatprep.subr.mxu0 0.0
    %847 = vmatpush1.msra.mxu0 0.0
    %848 = vmatprep.subr.mxu0 0.0
    %849 = vmatpush1.msra.mxu0 0.0
    %850 = vmatprep.subr.mxu0 0.0
    %851 = vmatpush1.msra.mxu0 0.0
    %852 = vmatprep.subr.mxu0 0.0
    %853 = vmatpush1.msra.mxu0 0.0
    %854 = vmatprep.subr.mxu0 0.0
    %855 = vmatpush1.msra.mxu0 0.0
    %856 = vmatprep.mubr.f32.mxu0 0.0
    %857 = vmatmul.mubr.f32.gmra.mrb[0].mxu0 %v790
    %v858 = vpop.f32.mrb[0].mxu0
    %v859 = vadd.f32 0.0, %v858
    %v860 = vpop.f32.mrb[0].mxu0
    %v861 = vadd.f32 0.0, %v860
    %862 = vdwg.mxu0
    %v863 = vadd.f32 %v785, %v859
    %v864 = vadd.f32 %v786, %v861
    %v865 = vxor.u32 %v863, 2147483648
    %v866 = vxor.u32 %v864, 2147483648
    %v867 = vmul.f32 %v865, 1.442695
    %v868 = vpow.pop %v867
    %v869 = vmul.f32 %v866, 1.442695
    %v870 = vpow.pop %v869
    %v871 = vadd.f32 %v868, 1.0
    %v872 = vadd.f32 %v870, 1.0
    %v873 = vrcp.pop %v871
    %v874 = vmul.f32 1.0, %v873
    %v875 = vrcp.pop %v872
    %v876 = vmul.f32 1.0, %v875
    %v877 = vtanh.pop %v864
    %v878 = vmul.f32 %v874, %v782
    %v879 = vmul.f32 %v874, %v877
    %881 = vrot.lane.b32.xlu0 %v879, 64
    %v882 = vpop.permute.xlu0 %881
    %v884 = vadd.f32 %v878, %v882
    %v885 = vtanh.pop %v884
    %v886 = vmul.f32 %v876, %v885
    %v887 = vld [vmem:[#allocation2 + $0x60] sm:$0xff]
    %v888 = vld [vmem:[#allocation2 + $0x68] sm:$0xff]
    %890 = vrot.lane.b32.xlu0 %v886, 64
    %v891 = vpop.permute.xlu0 %890
    %v892 = vsel %vm278, %v891, 0
    %894 = vmatprep.subr.mxu0 %v263
    %895 = vmatpush1.msra.mxu0 %v262
    %896 = vmatprep.subr.mxu0 %v265
    %897 = vmatpush1.msra.mxu0 %v264
    %898 = vmatprep.subr.mxu0 %v267
    %899 = vmatpush1.msra.mxu0 %v266
    %900 = vmatprep.subr.mxu0 %v269
    %901 = vmatpush1.msra.mxu0 %v268
    %902 = vmatprep.subr.mxu0 %v271
    %903 = vmatpush1.msra.mxu0 %v270
    %904 = vmatprep.subr.mxu0 %v273
    %905 = vmatpush1.msra.mxu0 %v272
    %906 = vmatprep.subr.mxu0 %v275
    %907 = vmatpush1.msra.mxu0 %v274
    %908 = vmatprep.subr.mxu0 %v277
    %909 = vmatpush1.msra.mxu0 %v276
    %910 = vmatprep.subr.mxu0 0.0
    %911 = vmatpush1.msra.mxu0 0.0
    %912 = vmatprep.subr.mxu0 0.0
    %913 = vmatpush1.msra.mxu0 0.0
    %914 = vmatprep.subr.mxu0 0.0
    %915 = vmatpush1.msra.mxu0 0.0
    %916 = vmatprep.subr.mxu0 0.0
    %917 = vmatpush1.msra.mxu0 0.0
    %918 = vmatprep.subr.mxu0 0.0
    %919 = vmatpush1.msra.mxu0 0.0
    %920 = vmatprep.subr.mxu0 0.0
    %921 = vmatpush1.msra.mxu0 0.0
    %922 = vmatprep.subr.mxu0 0.0
    %923 = vmatpush1.msra.mxu0 0.0
    %924 = vmatprep.subr.mxu0 0.0
    %925 = vmatpush1.msra.mxu0 0.0
    %926 = vmatprep.subr.mxu0 0.0
    %927 = vmatpush1.msra.mxu0 0.0
    %928 = vmatprep.subr.mxu0 0.0
    %929 = vmatpush1.msra.mxu0 0.0
    %930 = vmatprep.subr.mxu0 0.0
    %931 = vmatpush1.msra.mxu0 0.0
    %932 = vmatprep.subr.mxu0 0.0
    %933 = vmatpush1.msra.mxu0 0.0
    %934 = vmatprep.subr.mxu0 0.0
    %935 = vmatpush1.msra.mxu0 0.0
    %936 = vmatprep.subr.mxu0 0.0
    %937 = vmatpush1.msra.mxu0 0.0
    %938 = vmatprep.subr.mxu0 0.0
    %939 = vmatpush1.msra.mxu0 0.0
    %940 = vmatprep.subr.mxu0 0.0
    %941 = vmatpush1.msra.mxu0 0.0
    %942 = vmatprep.subr.mxu0 0.0
    %943 = vmatpush1.msra.mxu0 0.0
    %944 = vmatprep.subr.mxu0 0.0
    %945 = vmatpush1.msra.mxu0 0.0
    %946 = vmatprep.subr.mxu0 0.0
    %947 = vmatpush1.msra.mxu0 0.0
    %948 = vmatprep.subr.mxu0 0.0
    %949 = vmatpush1.msra.mxu0 0.0
    %950 = vmatprep.subr.mxu0 0.0
    %951 = vmatpush1.msra.mxu0 0.0
    %952 = vmatprep.subr.mxu0 0.0
    %953 = vmatpush1.msra.mxu0 0.0
    %954 = vmatprep.subr.mxu0 0.0
    %955 = vmatpush1.msra.mxu0 0.0
    %956 = vmatprep.subr.mxu0 0.0
    %957 = vmatpush1.msra.mxu0 0.0
    %958 = vmatprep.mubr.f32.mxu0 0.0
    %959 = vmatmul.mubr.f32.gmra.mrb[0].mxu0 %v892
    %v960 = vpop.f32.mrb[0].mxu0
    %v961 = vadd.f32 0.0, %v960
    %v962 = vpop.f32.mrb[0].mxu0
    %v963 = vadd.f32 0.0, %v962
    %964 = vdwg.mxu0
    %v965 = vadd.f32 %v887, %v961
    %v966 = vadd.f32 %v888, %v963
    %v967 = vxor.u32 %v965, 2147483648
    %v968 = vxor.u32 %v966, 2147483648
    %v969 = vmul.f32 %v967, 1.442695
    %v970 = vpow.pop %v969
    %v971 = vmul.f32 %v968, 1.442695
    %v972 = vpow.pop %v971
    %v973 = vadd.f32 %v970, 1.0
    %v974 = vadd.f32 %v972, 1.0
    %v975 = vrcp.pop %v973
    %v976 = vmul.f32 1.0, %v975
    %v977 = vrcp.pop %v974
    %v978 = vmul.f32 1.0, %v977
    %v979 = vtanh.pop %v966
    %v980 = vmul.f32 %v976, %v884
    %v981 = vmul.f32 %v976, %v979
    %983 = vrot.lane.b32.xlu0 %v981, 64
    %v984 = vpop.permute.xlu0 %983
    %v986 = vadd.f32 %v980, %v984
    %v987 = vtanh.pop %v986
    %v988 = vmul.f32 %v978, %v987
    %v989 = vld [vmem:[#allocation2 + $0x70] sm:$0xff]
    %v990 = vld [vmem:[#allocation2 + $0x78] sm:$0xff]
    %992 = vrot.lane.b32.xlu0 %v988, 64
    %v993 = vpop.permute.xlu0 %992
    %v994 = vsel %vm278, %v993, 0
    %996 = vmatprep.subr.mxu0 %v263
    %997 = vmatpush1.msra.mxu0 %v262
    %998 = vmatprep.subr.mxu0 %v265
    %999 = vmatpush1.msra.mxu0 %v264
    %1000 = vmatprep.subr.mxu0 %v267
    %1001 = vmatpush1.msra.mxu0 %v266
    %1002 = vmatprep.subr.mxu0 %v269
    %1003 = vmatpush1.msra.mxu0 %v268
    %1004 = vmatprep.subr.mxu0 %v271
    %1005 = vmatpush1.msra.mxu0 %v270
    %1006 = vmatprep.subr.mxu0 %v273
    %1007 = vmatpush1.msra.mxu0 %v272
    %1008 = vmatprep.subr.mxu0 %v275
    %1009 = vmatpush1.msra.mxu0 %v274
    %1010 = vmatprep.subr.mxu0 %v277
    %1011 = vmatpush1.msra.mxu0 %v276
    %1012 = vmatprep.subr.mxu0 0.0
    %1013 = vmatpush1.msra.mxu0 0.0
    %1014 = vmatprep.subr.mxu0 0.0
    %1015 = vmatpush1.msra.mxu0 0.0
    %1016 = vmatprep.subr.mxu0 0.0
    %1017 = vmatpush1.msra.mxu0 0.0
    %1018 = vmatprep.subr.mxu0 0.0
    %1019 = vmatpush1.msra.mxu0 0.0
    %1020 = vmatprep.subr.mxu0 0.0
    %1021 = vmatpush1.msra.mxu0 0.0
    %1022 = vmatprep.subr.mxu0 0.0
    %1023 = vmatpush1.msra.mxu0 0.0
    %1024 = vmatprep.subr.mxu0 0.0
    %1025 = vmatpush1.msra.mxu0 0.0
    %1026 = vmatprep.subr.mxu0 0.0
    %1027 = vmatpush1.msra.mxu0 0.0
    %1028 = vmatprep.subr.mxu0 0.0
    %1029 = vmatpush1.msra.mxu0 0.0
    %1030 = vmatprep.subr.mxu0 0.0
    %1031 = vmatpush1.msra.mxu0 0.0
    %1032 = vmatprep.subr.mxu0 0.0
    %1033 = vmatpush1.msra.mxu0 0.0
    %1034 = vmatprep.subr.mxu0 0.0
    %1035 = vmatpush1.msra.mxu0 0.0
    %1036 = vmatprep.subr.mxu0 0.0
    %1037 = vmatpush1.msra.mxu0 0.0
    %1038 = vmatprep.subr.mxu0 0.0
    %1039 = vmatpush1.msra.mxu0 0.0
    %1040 = vmatprep.subr.mxu0 0.0
    %1041 = vmatpush1.msra.mxu0 0.0
    %1042 = vmatprep.subr.mxu0 0.0
    %1043 = vmatpush1.msra.mxu0 0.0
    %1044 = vmatprep.subr.mxu0 0.0
    %1045 = vmatpush1.msra.mxu0 0.0
    %1046 = vmatprep.subr.mxu0 0.0
    %1047 = vmatpush1.msra.mxu0 0.0
    %1048 = vmatprep.subr.mxu0 0.0
    %1049 = vmatpush1.msra.mxu0 0.0
    %1050 = vmatprep.subr.mxu0 0.0
    %1051 = vmatpush1.msra.mxu0 0.0
    %1052 = vmatprep.subr.mxu0 0.0
    %1053 = vmatpush1.msra.mxu0 0.0
    %1054 = vmatprep.subr.mxu0 0.0
    %1055 = vmatpush1.msra.mxu0 0.0
    %1056 = vmatprep.subr.mxu0 0.0
    %1057 = vmatpush1.msra.mxu0 0.0
    %1058 = vmatprep.subr.mxu0 0.0
    %1059 = vmatpush1.msra.mxu0 0.0
    %1060 = vmatprep.mubr.f32.mxu0 0.0
    %1061 = vmatmul.mubr.f32.gmra.mrb[0].mxu0 %v994
    %v1062 = vpop.f32.mrb[0].mxu0
    %v1063 = vadd.f32 0.0, %v1062
    %v1064 = vpop.f32.mrb[0].mxu0
    %v1065 = vadd.f32 0.0, %v1064
    %1066 = vdwg.mxu0
    %v1067 = vadd.f32 %v989, %v1063
    %v1068 = vadd.f32 %v990, %v1065
    %v1069 = vxor.u32 %v1067, 2147483648
    %v1070 = vxor.u32 %v1068, 2147483648
    %v1071 = vmul.f32 %v1069, 1.442695
    %v1072 = vpow.pop %v1071
    %v1073 = vmul.f32 %v1070, 1.442695
    %v1074 = vpow.pop %v1073
    %v1075 = vadd.f32 %v1072, 1.0
    %v1076 = vadd.f32 %v1074, 1.0
    %v1077 = vrcp.pop %v1075
    %v1078 = vmul.f32 1.0, %v1077
    %v1079 = vrcp.pop %v1076
    %v1080 = vmul.f32 1.0, %v1079
    %v1081 = vtanh.pop %v1068
    %v1082 = vmul.f32 %v1078, %v986
    %v1083 = vmul.f32 %v1078, %v1081
    %1085 = vrot.lane.b32.xlu0 %v1083, 64
    %v1086 = vpop.permute.xlu0 %1085
    %v1088 = vadd.f32 %v1082, %v1086
    %v1089 = vtanh.pop %v1088
    %v1090 = vmul.f32 %v1080, %v1089
    %v1091 = vld [vmem:[#allocation9] sm:$0xff]
    %v1092 = vld [vmem:[#allocation9 + $0x8] sm:$0xff]
    %v1093 = vld [vmem:[#allocation9 + $0x10] sm:$0xff]
    %v1094 = vld [vmem:[#allocation9 + $0x18] sm:$0xff]
    %v1095 = vld [vmem:[#allocation9 + $0x20] sm:$0xff]
    %v1096 = vld [vmem:[#allocation9 + $0x28] sm:$0xff]
    %v1097 = vld [vmem:[#allocation9 + $0x30] sm:$0xff]
    %v1098 = vld [vmem:[#allocation9 + $0x38] sm:$0xff]
    %v1099 = vld [vmem:[%s5] sm:$0x1]
    %v1101 = vlaneseq
    %v1102 = vshrl.u32 %v1101, 7
    %v1103 = vsub.s32 0, %v1102
    %v1104 = vrot.slane %v1099, %v1103
    %1107 = vrot.lane.b32.xlu0 %v1090, 64
    %v1108 = vpop.permute.xlu0 %1107
    %v1109 = vsel %vm278, %v1108, 0
    %1111 = vmatprep.subr.mxu0 0.0
    %1112 = vmatpush1.msra.mxu0 %v1091
    %1113 = vmatprep.subr.mxu0 0.0
    %1114 = vmatpush1.msra.mxu0 %v1092
    %1115 = vmatprep.subr.mxu0 0.0
    %1116 = vmatpush1.msra.mxu0 %v1093
    %1117 = vmatprep.subr.mxu0 0.0
    %1118 = vmatpush1.msra.mxu0 %v1094
    %1119 = vmatprep.subr.mxu0 0.0
    %1120 = vmatpush1.msra.mxu0 %v1095
    %1121 = vmatprep.subr.mxu0 0.0
    %1122 = vmatpush1.msra.mxu0 %v1096
    %1123 = vmatprep.subr.mxu0 0.0
    %1124 = vmatpush1.msra.mxu0 %v1097
    %1125 = vmatprep.subr.mxu0 0.0
    %1126 = vmatpush1.msra.mxu0 %v1098
    %1127 = vmatprep.subr.mxu0 0.0
    %1128 = vmatpush1.msra.mxu0 0.0
    %1129 = vmatprep.subr.mxu0 0.0
    %1130 = vmatpush1.msra.mxu0 0.0
    %1131 = vmatprep.subr.mxu0 0.0
    %1132 = vmatpush1.msra.mxu0 0.0
    %1133 = vmatprep.subr.mxu0 0.0
    %1134 = vmatpush1.msra.mxu0 0.0
    %1135 = vmatprep.subr.mxu0 0.0
    %1136 = vmatpush1.msra.mxu0 0.0
    %1137 = vmatprep.subr.mxu0 0.0
    %1138 = vmatpush1.msra.mxu0 0.0
    %1139 = vmatprep.subr.mxu0 0.0
    %1140 = vmatpush1.msra.mxu0 0.0
    %1141 = vmatprep.subr.mxu0 0.0
    %1142 = vmatpush1.msra.mxu0 0.0
    %1143 = vmatprep.subr.mxu0 0.0
    %1144 = vmatpush1.msra.mxu0 0.0
    %1145 = vmatprep.subr.mxu0 0.0
    %1146 = vmatpush1.msra.mxu0 0.0
    %1147 = vmatprep.subr.mxu0 0.0
    %1148 = vmatpush1.msra.mxu0 0.0
    %1149 = vmatprep.subr.mxu0 0.0
    %1150 = vmatpush1.msra.mxu0 0.0
    %1151 = vmatprep.subr.mxu0 0.0
    %1152 = vmatpush1.msra.mxu0 0.0
    %1153 = vmatprep.subr.mxu0 0.0
    %1154 = vmatpush1.msra.mxu0 0.0
    %1155 = vmatprep.subr.mxu0 0.0
    %1156 = vmatpush1.msra.mxu0 0.0
    %1157 = vmatprep.subr.mxu0 0.0
    %1158 = vmatpush1.msra.mxu0 0.0
    %1159 = vmatprep.subr.mxu0 0.0
    %1160 = vmatpush1.msra.mxu0 0.0
    %1161 = vmatprep.subr.mxu0 0.0
    %1162 = vmatpush1.msra.mxu0 0.0
    %1163 = vmatprep.subr.mxu0 0.0
    %1164 = vmatpush1.msra.mxu0 0.0
    %1165 = vmatprep.subr.mxu0 0.0
    %1166 = vmatpush1.msra.mxu0 0.0
    %1167 = vmatprep.subr.mxu0 0.0
    %1168 = vmatpush1.msra.mxu0 0.0
    %1169 = vmatprep.subr.mxu0 0.0
    %1170 = vmatpush1.msra.mxu0 0.0
    %1171 = vmatprep.subr.mxu0 0.0
    %1172 = vmatpush1.msra.mxu0 0.0
    %1173 = vmatprep.subr.mxu0 0.0
    %1174 = vmatpush1.msra.mxu0 0.0
    %1175 = vmatprep.mubr.f32.mxu0 0.0
    %1176 = vmatmul.mubr.f32.gmra.mrb[0].mxu0 %v1109
    %v1177 = vpop.f32.mrb[0].mxu0
    %v1178 = vadd.f32 %v1104, %v1177
    %v1179 = vpop.f32.mrb[0].mxu0
    %1180 = vdwg.mxu0
    %1181 = vst [vmem:[#allocation11] sm:$0xff] %v1178
    // Predicated region
    $region42: #{tpu_custom_call.1} parent=1 // pred_check
      _
    $region43: #{tpu_custom_call.1} parent=1 // pred_check_branch
      %1183 = sbr.rel (0) target = $region45
    $region44: #{tpu_custom_call.1} parent=1 // pred_region
      %s1185 = ssub.s32 128, 128
      %1186 = vsyncadd [#allocation5], %s1185
      %s1188 = sshll.u32 [#allocation11], 4
      %s1189 = int_to_ptr.vmem [resolvable:$true] %s1188
      %1191 = dma.vmem_to_hbm [thread:$0]  %s1189, 128, %s6, [#allocation5]
    $region45: #{tpu_custom_call.1} parent=1 // pred_fallthru
      _
    // Predicated region
    $region46: #{tpu_custom_call.1} parent=1 // pred_check
      _
    $region47: #{tpu_custom_call.1} parent=1 // pred_check_branch
      %1193 = sbr.rel (0) target = $region49
    $region48: #{tpu_custom_call.1} parent=1 // pred_region
      %1194 = dma.done [#allocation5], 128
    $region49: #{tpu_custom_call.1} parent=1 // pred_fallthru
      _
    %1195 = vsyncpa [#allocation4], 1
    %1196 = vsyncpa [#allocation7], 1
    %1197 = vsyncpa [#allocation10], 1
    %1198 = vsyncpa [#allocation5], 1

</llo_original>
